<compile_context>
chip_gen: v7x
topology: tpu7x:2x2x1
jax: 0.10.0
libtpu: 0.0.40
codegen_flags: <defaults>
</compile_context>

<pallas_src>
import math

import jax
import jax.numpy as jnp
from jax.experimental import pallas as pl
from jax.experimental.pallas import tpu as pltpu


LANE = 128          # feature padding target (vreg lane width)
SUBLANE_TILE = 16   # batch padding target (safe for bf16 sublane packing)


def _round_up(n, m):
    return ((n + m - 1) // m) * m


def _cdiv(a, b):
    return -(-a // b)


def _pad2(a, rows, cols):
    r, c = a.shape
    return jnp.pad(a, ((0, rows - r), (0, cols - c)))


def _vmem_capacity_bytes():
    try:
        return int(pltpu.get_tpu_info().vmem_capacity_bytes)
    except Exception:
        return 64 * 1024 * 1024   # conservative (v7x per-TensorCore VMEM)


# ------------------------------ fused kernel --------------------------------

def _make_fused_kernel(widths, compute_dtype):
    """Fused forward kernel.

    Ref order: x, w_in, b_in, [gamma, beta, w, b] * n_hidden, w_out, b_out, out.
    Weights are pre-transposed ([D_in_pad, D_out_pad], compute_dtype); biases /
    LN params are f32 [1, D_pad].  All padded lanes of params are exactly 0.
    """
    n_hidden = len(widths) - 1
    inv_sqrt2 = 1.0 / math.sqrt(2.0)

    def kernel(*refs):
        x_ref = refs[0]
        w_in_ref, b_in_ref = refs[1], refs[2]
        w_out_ref, b_out_ref = refs[3 + 4 * n_hidden], refs[4 + 4 * n_hidden]
        o_ref = refs[5 + 4 * n_hidden]

        def linear(a_f32, w_ref, b_ref):
            # bf16 (or f32) MXU matmul with f32 accumulation, f32 bias add.
            return (
                jnp.dot(a_f32.astype(compute_dtype), w_ref[...],
                        preferred_element_type=jnp.float32)
                + b_ref[...]
            )

        # z = linear_in(x); padded lanes of z are exactly 0 (zero-padded W/b).
        z = linear(x_ref[...], w_in_ref, b_in_ref)

        for h in range(n_hidden):
            g_ref, be_ref, w_ref, b_ref = refs[3 + 4 * h: 7 + 4 * h]
            inv_d = 1.0 / widths[h]   # real LayerNorm width (== widths[h+1])

            # LayerNorm (f32, eps=1e-5, biased variance) via E[z^2] - E[z]^2.
            # Padded lanes of z are exactly 0, so both lane-axis sums equal the
            # real-feature sums; the two reductions are independent (no serial
            # reduce->subtract->reduce chain, no centered temporary).
            mean = jnp.sum(z, axis=-1, keepdims=True) * inv_d
            mean_sq = jnp.sum(z * z, axis=-1, keepdims=True) * inv_d
            var = mean_sq - mean * mean
            zn = (z - mean) * jax.lax.rsqrt(var + 1e-5)
            # gamma/beta are 0 on padded lanes -> padded lanes return to 0.
            zn = zn * g_ref[...] + be_ref[...]

            # Exact erf GELU (PyTorch nn.GELU() default), in f32.
            g = 0.5 * zn * (1.0 + jax.lax.erf(zn * inv_sqrt2))

            z = linear(g, w_ref, b_ref)

        o_ref[...] = linear(z, w_out_ref, b_out_ref).astype(o_ref.dtype)

    return kernel


# --------------------------- parameter handling ------------------------------

def init_linear_params(key, d_in, d_out):
    # nn.Linear default init: uniform(-1/sqrt(fan_in), 1/sqrt(fan_in)).
    # Weight stored pre-transposed as [d_in, d_out].
    kw, kb = jax.random.split(key)
    bound = 1.0 / math.sqrt(d_in)
    w = jax.random.uniform(kw, (d_in, d_out), jnp.float32, -bound, bound)
    b = jax.random.uniform(kb, (1, d_out), jnp.float32, -bound, bound)
    return w, b


def init_standard_mlp_params(key, dim_in, dim_out, widths):
    # The PyTorch module applies LayerNorm(widths[i+1]) to a widths[i]-wide
    # activation -> it only works when consecutive widths match.
    for i in range(len(widths) - 1):
        assert widths[i] == widths[i + 1], (
            "StandardMLP requires widths[i] == widths[i+1] "
            "(LayerNorm(widths[i+1]) is applied to a widths[i]-wide tensor).")
    keys = jax.random.split(key, 2 + (len(widths) - 1))
    params = {}
    params["linear_in"] = init_linear_params(keys[0], dim_in, widths[0])
    params["linear_out"] = init_linear_params(keys[1], widths[-1], dim_out)
    hidden = []
    for i in range(len(widths) - 1):
        w, b = init_linear_params(keys[2 + i], widths[i], widths[i + 1])
        gamma = jnp.ones((1, widths[i + 1]), jnp.float32)   # PyTorch default
        beta = jnp.zeros((1, widths[i + 1]), jnp.float32)
        hidden.append((gamma, beta, w, b))
    params["hidden"] = hidden
    return params


def pack_params(params, dim_in, dim_out, widths, compute_dtype=jnp.bfloat16):
    """Zero-pad all feature dims to multiples of 128; weights cast to the MXU
    compute dtype (bf16), biases / LN params kept f32.  Returns the flat list
    of arrays in kernel ref order (done once, outside the hot path)."""
    flat = []
    w, b = params["linear_in"]
    flat.append(_pad2(w, _round_up(dim_in, LANE),
                      _round_up(widths[0], LANE)).astype(compute_dtype))
    flat.append(_pad2(b, 1, _round_up(widths[0], LANE)))
    for h, (gamma, beta, w, b) in enumerate(params["hidden"]):
        d_in_h, d_out_h = widths[h], widths[h + 1]
        flat.append(_pad2(gamma, 1, _round_up(d_in_h, LANE)))   # padded lanes = 0
        flat.append(_pad2(beta, 1, _round_up(d_in_h, LANE)))
        flat.append(_pad2(w, _round_up(d_in_h, LANE),
                          _round_up(d_out_h, LANE)).astype(compute_dtype))
        flat.append(_pad2(b, 1, _round_up(d_out_h, LANE)))
    w, b = params["linear_out"]
    flat.append(_pad2(w, _round_up(widths[-1], LANE),
                      _round_up(dim_out, LANE)).astype(compute_dtype))
    flat.append(_pad2(b, 1, _round_up(dim_out, LANE)))
    return flat


# ------------------------------ forward wrapper ------------------------------

def fused_standard_mlp(packed_params, x, *, dim_in, dim_out, widths,
                       compute_dtype=jnp.bfloat16, out_dtype=None,
                       max_tile_b=1024):
    B = x.shape[0]
    out_dtype = x.dtype if out_dtype is None else out_dtype
    din_pad = _round_up(dim_in, LANE)
    dout_pad = _round_up(dim_out, LANE)
    w_pads = [_round_up(w, LANE) for w in widths]
    max_w_pad = max(w_pads + [din_pad, dout_pad])

    itemsize_c = jnp.dtype(compute_dtype).itemsize
    itemsize_o = jnp.dtype(out_dtype).itemsize

    # ----- VMEM budget (params single-buffered, I/O tiles double-buffered) ----
    vmem_cap = _vmem_capacity_bytes()
    param_bytes = sum(int(p.size) * p.dtype.itemsize for p in packed_params)
    if param_bytes > int(0.70 * vmem_cap):
        # TODO(synk): fall back to per-layer weight streaming (memory_space=
        # pl.ANY + manual double-buffered pltpu.make_async_copy) when resident
        # weights exceed VMEM (relevant on v7x's 64 MiB for very wide MLPs).
        pass
    per_row_bytes = (2 * din_pad * itemsize_c        # input tile, double-buffered
                     + 2 * dout_pad * itemsize_o     # output tile, double-buffered
                     + 6 * max_w_pad * 4)            # f32 activation temporaries
    avail = int(0.75 * vmem_cap) - param_bytes
    vmem_tile_cap = max(
        SUBLANE_TILE,
        (max(avail, 0) // per_row_bytes) // SUBLANE_TILE * SUBLANE_TILE)
    max_tile_b = max(SUBLANE_TILE, min(max_tile_b, vmem_tile_cap))

    # ----- batch tiling: fat tiles; >= 2 grid steps when the batch allows so
    # ("parallel",) shards across v7x's 2 TensorCores; padding <= ~one tile ----
    if B <= 2 * SUBLANE_TILE:
        n_tiles = 1
    else:
        n_tiles = max(2, _cdiv(B, max_tile_b))
        if n_tiles % 2:
            n_tiles += 1                      # balance the two TensorCores
    tile_b = min(_round_up(_cdiv(B, n_tiles), SUBLANE_TILE), max_tile_b)
    n_tiles = _cdiv(B, tile_b)
    b_pad = n_tiles * tile_b

    x_pad = _pad2(x, b_pad, din_pad).astype(compute_dtype)

    # ----- advisory cost estimate (padded sizes = real work) -----
    dims_pad = [din_pad] + w_pads + [dout_pad]
    flops = 2 * b_pad * sum(dims_pad[i] * dims_pad[i + 1]
                            for i in range(len(dims_pad) - 1))
    transcendentals = b_pad * sum(w_pads[:-1])
    bytes_accessed = (x_pad.size * itemsize_c + param_bytes
                      + b_pad * dout_pad * itemsize_o)

    # ----- explicit scoped-VMEM limit with ~25% headroom, capped to the chip --
    vmem_limit = param_bytes + tile_b * per_row_bytes
    vmem_limit = max(int(vmem_limit * 1.25), 32 * 1024 * 1024)
    vmem_limit = min(vmem_limit, int(0.9 * vmem_cap))

    kernel = _make_fused_kernel(widths, compute_dtype)
    out_shape = jax.ShapeDtypeStruct((b_pad, dout_pad), out_dtype)
    out_spec = pl.BlockSpec((tile_b, dout_pad), lambda i: (i, 0))

    def run(param_pipeline_mode):
        in_specs = [pl.BlockSpec((tile_b, din_pad), lambda i: (i, 0))]
        for p in packed_params:
            # Constant index_map -> params are fetched once and stay resident.
            in_specs.append(pl.BlockSpec(p.shape, lambda i: (0, 0),
                                         pipeline_mode=param_pipeline_mode))
        return pl.pallas_call(
            kernel,
            out_shape=out_shape,
            grid=(n_tiles,),
            in_specs=in_specs,
            out_specs=out_spec,
            compiler_params=pltpu.CompilerParams(
                dimension_semantics=("parallel",),
                vmem_limit_bytes=vmem_limit),
            cost_estimate=pl.CostEstimate(
                flops=flops, transcendentals=transcendentals,
                bytes_accessed=bytes_accessed),
        )(x_pad, *packed_params)

    try:
        # Single-buffer the resident parameters (halves their VMEM footprint).
        out = jax.block_until_ready(run(pl.Buffered(1)))
    except Exception:
        # Conservative fallback: default (double-buffered) pipelining.
        out = jax.block_until_ready(run(None))

    return out[:B, :dim_out]


# ------------------------------- reference -----------------------------------

def standard_mlp_reference(params, x, compute_dtype=jnp.bfloat16):
    # Pure-JAX reference mirroring the kernel's numerics (bf16 matmul inputs,
    # f32 accumulation, f32 LayerNorm/GELU, exact-erf GELU).
    def linear(a, w, b):
        return jnp.dot(a.astype(compute_dtype), w.astype(compute_dtype),
                       preferred_element_type=jnp.float32) + b

    w, b = params["linear_in"]
    z = linear(x, w, b)
    for gamma, beta, w, b in params["hidden"]:
        mean = jnp.mean(z, axis=-1, keepdims=True)
        var = jnp.mean((z - mean) ** 2, axis=-1, keepdims=True)
        zn = (z - mean) * jax.lax.rsqrt(var + 1e-5) * gamma + beta
        g = 0.5 * zn * (1.0 + jax.lax.erf(zn / math.sqrt(2.0)))
        z = linear(g, w, b)
    w, b = params["linear_out"]
    return linear(z, w, b)


# --------------------------------- main ---------------------------------------

if __name__ == "__main__":
    dim_in, dim_out = 16, 8
    widths = [32, 32, 32]   # -> 2 hidden (LayerNorm + GELU + Linear) blocks
    batch = 4

    key = jax.random.PRNGKey(0)
    kx, kp = jax.random.split(key)
    x = jax.random.normal(kx, (batch, dim_in), jnp.float32)

    params = init_standard_mlp_params(kp, dim_in, dim_out, widths)
    packed = pack_params(params, dim_in, dim_out, widths)   # pad + bf16, once

    out = fused_standard_mlp(packed, x, dim_in=dim_in, dim_out=dim_out,
                             widths=widths)
    out = jax.block_until_ready(out)

    ref = standard_mlp_reference(params, x)
    assert out.shape == (batch, dim_out)
    assert jnp.allclose(out, ref, atol=1e-3, rtol=1e-3), "mismatch vs reference"

    print("KERNEL_OK")
</pallas_src>

<mosaic_0001>
module attributes {stable_mosaic.version = 11 : i64} {
  func.func @kernel(%arg0: i32, %arg1: memref<16x128xbf16, #tpu.memory_space<vmem>>, %arg2: memref<128x128xbf16, #tpu.memory_space<vmem>>, %arg3: memref<1x128xf32, #tpu.memory_space<vmem>>, %arg4: memref<1x128xf32, #tpu.memory_space<vmem>>, %arg5: memref<1x128xf32, #tpu.memory_space<vmem>>, %arg6: memref<128x128xbf16, #tpu.memory_space<vmem>>, %arg7: memref<1x128xf32, #tpu.memory_space<vmem>>, %arg8: memref<1x128xf32, #tpu.memory_space<vmem>>, %arg9: memref<1x128xf32, #tpu.memory_space<vmem>>, %arg10: memref<128x128xbf16, #tpu.memory_space<vmem>>, %arg11: memref<1x128xf32, #tpu.memory_space<vmem>>, %arg12: memref<128x128xbf16, #tpu.memory_space<vmem>>, %arg13: memref<1x128xf32, #tpu.memory_space<vmem>>, %arg14: memref<16x128xf32, #tpu.memory_space<vmem>>) attributes {dimension_semantics = [#tpu.dimension_semantics<parallel>], iteration_bounds = array<i64: 1>, scalar_prefetch = 0 : i64, scratch_operands = 0 : i64, tpu.core_type = #tpu.core_type<tc>, window_params = [{transform_indices = @transform_0, window_bounds = array<i64: 16, 128>}, {pipeline_mode = #tpu.pipeline_mode<synchronous>, transform_indices = @transform_1, window_bounds = array<i64: 128, 128>}, {pipeline_mode = #tpu.pipeline_mode<synchronous>, transform_indices = @transform_2, window_bounds = array<i64: 1, 128>}, {pipeline_mode = #tpu.pipeline_mode<synchronous>, transform_indices = @transform_3, window_bounds = array<i64: 1, 128>}, {pipeline_mode = #tpu.pipeline_mode<synchronous>, transform_indices = @transform_4, window_bounds = array<i64: 1, 128>}, {pipeline_mode = #tpu.pipeline_mode<synchronous>, transform_indices = @transform_5, window_bounds = array<i64: 128, 128>}, {pipeline_mode = #tpu.pipeline_mode<synchronous>, transform_indices = @transform_6, window_bounds = array<i64: 1, 128>}, {pipeline_mode = #tpu.pipeline_mode<synchronous>, transform_indices = @transform_7, window_bounds = array<i64: 1, 128>}, {pipeline_mode = #tpu.pipeline_mode<synchronous>, transform_indices = @transform_8, window_bounds = array<i64: 1, 128>}, {pipeline_mode = #tpu.pipeline_mode<synchronous>, transform_indices = @transform_9, window_bounds = array<i64: 128, 128>}, {pipeline_mode = #tpu.pipeline_mode<synchronous>, transform_indices = @transform_10, window_bounds = array<i64: 1, 128>}, {pipeline_mode = #tpu.pipeline_mode<synchronous>, transform_indices = @transform_11, window_bounds = array<i64: 128, 128>}, {pipeline_mode = #tpu.pipeline_mode<synchronous>, transform_indices = @transform_12, window_bounds = array<i64: 1, 128>}, {transform_indices = @transform_13, window_bounds = array<i64: 16, 128>}]} {
    %c0 = arith.constant 0 : index
    %c0_0 = arith.constant 0 : index
    %0 = vector.load %arg1[%c0, %c0_0] : memref<16x128xbf16, #tpu.memory_space<vmem>>, vector<16x128xbf16>
    %c0_1 = arith.constant 0 : index
    %c0_2 = arith.constant 0 : index
    %1 = vector.load %arg2[%c0_1, %c0_2] : memref<128x128xbf16, #tpu.memory_space<vmem>>, vector<128x128xbf16>
    %cst = arith.constant dense<0.000000e+00> : vector<16x128xf32>
    %2 = tpu.matmul %0, %1, %cst {dimension_numbers = #tpu.dot_dimension_numbers<[1], [0], [0], [1], [0, 0, 1, 1], [], []>} : vector<16x128xbf16>, vector<128x128xbf16>, vector<16x128xf32> -> vector<16x128xf32>
    %c0_3 = arith.constant 0 : index
    %c0_4 = arith.constant 0 : index
    %3 = vector.load %arg3[%c0_3, %c0_4] : memref<1x128xf32, #tpu.memory_space<vmem>>, vector<1x128xf32>
    %4 = vector.broadcast %3 : vector<1x128xf32> to vector<16x128xf32>
    %5 = arith.addf %2, %4 : vector<16x128xf32>
    %cst_5 = arith.constant dense<0.000000e+00> : vector<16xf32>
    %6 = vector.multi_reduction <add>, %5, %cst_5 [1] : vector<16x128xf32> to vector<16xf32>
    %7 = vector.shape_cast %6 : vector<16xf32> to vector<16x1xf32>
    %cst_6 = arith.constant 3.125000e-02 : f32
    %8 = vector.broadcast %cst_6 : f32 to vector<16x1xf32>
    %9 = arith.mulf %7, %8 : vector<16x1xf32>
    %10 = arith.mulf %5, %5 : vector<16x128xf32>
    %cst_7 = arith.constant dense<0.000000e+00> : vector<16xf32>
    %11 = vector.multi_reduction <add>, %10, %cst_7 [1] : vector<16x128xf32> to vector<16xf32>
    %12 = vector.shape_cast %11 : vector<16xf32> to vector<16x1xf32>
    %cst_8 = arith.constant 3.125000e-02 : f32
    %13 = vector.broadcast %cst_8 : f32 to vector<16x1xf32>
    %14 = arith.mulf %12, %13 : vector<16x1xf32>
    %15 = arith.mulf %9, %9 : vector<16x1xf32>
    %16 = arith.subf %14, %15 : vector<16x1xf32>
    %17 = vector.broadcast %9 : vector<16x1xf32> to vector<16x128xf32>
    %18 = arith.subf %5, %17 : vector<16x128xf32>
    %cst_9 = arith.constant 9.99999974E-6 : f32
    %19 = vector.broadcast %cst_9 : f32 to vector<16x1xf32>
    %20 = arith.addf %16, %19 : vector<16x1xf32>
    %21 = math.rsqrt %20 : vector<16x1xf32>
    %22 = vector.broadcast %21 : vector<16x1xf32> to vector<16x128xf32>
    %23 = arith.mulf %18, %22 : vector<16x128xf32>
    %c0_10 = arith.constant 0 : index
    %c0_11 = arith.constant 0 : index
    %24 = vector.load %arg4[%c0_10, %c0_11] : memref<1x128xf32, #tpu.memory_space<vmem>>, vector<1x128xf32>
    %25 = vector.broadcast %24 : vector<1x128xf32> to vector<16x128xf32>
    %26 = arith.mulf %23, %25 : vector<16x128xf32>
    %c0_12 = arith.constant 0 : index
    %c0_13 = arith.constant 0 : index
    %27 = vector.load %arg5[%c0_12, %c0_13] : memref<1x128xf32, #tpu.memory_space<vmem>>, vector<1x128xf32>
    %28 = vector.broadcast %27 : vector<1x128xf32> to vector<16x128xf32>
    %29 = arith.addf %26, %28 : vector<16x128xf32>
    %cst_14 = arith.constant 5.000000e-01 : f32
    %30 = vector.broadcast %cst_14 : f32 to vector<16x128xf32>
    %31 = arith.mulf %30, %29 : vector<16x128xf32>
    %cst_15 = arith.constant 0.707106769 : f32
    %32 = vector.broadcast %cst_15 : f32 to vector<16x128xf32>
    %33 = arith.mulf %29, %32 : vector<16x128xf32>
    %34 = math.erf %33 : vector<16x128xf32>
    %cst_16 = arith.constant 1.000000e+00 : f32
    %35 = vector.broadcast %cst_16 : f32 to vector<16x128xf32>
    %36 = arith.addf %35, %34 : vector<16x128xf32>
    %37 = arith.mulf %31, %36 : vector<16x128xf32>
    %38 = arith.truncf %37 : vector<16x128xf32> to vector<16x128xbf16>
    %c0_17 = arith.constant 0 : index
    %c0_18 = arith.constant 0 : index
    %39 = vector.load %arg6[%c0_17, %c0_18] : memref<128x128xbf16, #tpu.memory_space<vmem>>, vector<128x128xbf16>
    %cst_19 = arith.constant dense<0.000000e+00> : vector<16x128xf32>
    %40 = tpu.matmul %38, %39, %cst_19 {dimension_numbers = #tpu.dot_dimension_numbers<[1], [0], [0], [1], [0, 0, 1, 1], [], []>} : vector<16x128xbf16>, vector<128x128xbf16>, vector<16x128xf32> -> vector<16x128xf32>
    %c0_20 = arith.constant 0 : index
    %c0_21 = arith.constant 0 : index
    %41 = vector.load %arg7[%c0_20, %c0_21] : memref<1x128xf32, #tpu.memory_space<vmem>>, vector<1x128xf32>
    %42 = vector.broadcast %41 : vector<1x128xf32> to vector<16x128xf32>
    %43 = arith.addf %40, %42 : vector<16x128xf32>
    %cst_22 = arith.constant dense<0.000000e+00> : vector<16xf32>
    %44 = vector.multi_reduction <add>, %43, %cst_22 [1] : vector<16x128xf32> to vector<16xf32>
    %45 = vector.shape_cast %44 : vector<16xf32> to vector<16x1xf32>
    %cst_23 = arith.constant 3.125000e-02 : f32
    %46 = vector.broadcast %cst_23 : f32 to vector<16x1xf32>
    %47 = arith.mulf %45, %46 : vector<16x1xf32>
    %48 = arith.mulf %43, %43 : vector<16x128xf32>
    %cst_24 = arith.constant dense<0.000000e+00> : vector<16xf32>
    %49 = vector.multi_reduction <add>, %48, %cst_24 [1] : vector<16x128xf32> to vector<16xf32>
    %50 = vector.shape_cast %49 : vector<16xf32> to vector<16x1xf32>
    %cst_25 = arith.constant 3.125000e-02 : f32
    %51 = vector.broadcast %cst_25 : f32 to vector<16x1xf32>
    %52 = arith.mulf %50, %51 : vector<16x1xf32>
    %53 = arith.mulf %47, %47 : vector<16x1xf32>
    %54 = arith.subf %52, %53 : vector<16x1xf32>
    %55 = vector.broadcast %47 : vector<16x1xf32> to vector<16x128xf32>
    %56 = arith.subf %43, %55 : vector<16x128xf32>
    %cst_26 = arith.constant 9.99999974E-6 : f32
    %57 = vector.broadcast %cst_26 : f32 to vector<16x1xf32>
    %58 = arith.addf %54, %57 : vector<16x1xf32>
    %59 = math.rsqrt %58 : vector<16x1xf32>
    %60 = vector.broadcast %59 : vector<16x1xf32> to vector<16x128xf32>
    %61 = arith.mulf %56, %60 : vector<16x128xf32>
    %c0_27 = arith.constant 0 : index
    %c0_28 = arith.constant 0 : index
    %62 = vector.load %arg8[%c0_27, %c0_28] : memref<1x128xf32, #tpu.memory_space<vmem>>, vector<1x128xf32>
    %63 = vector.broadcast %62 : vector<1x128xf32> to vector<16x128xf32>
    %64 = arith.mulf %61, %63 : vector<16x128xf32>
    %c0_29 = arith.constant 0 : index
    %c0_30 = arith.constant 0 : index
    %65 = vector.load %arg9[%c0_29, %c0_30] : memref<1x128xf32, #tpu.memory_space<vmem>>, vector<1x128xf32>
    %66 = vector.broadcast %65 : vector<1x128xf32> to vector<16x128xf32>
    %67 = arith.addf %64, %66 : vector<16x128xf32>
    %cst_31 = arith.constant 5.000000e-01 : f32
    %68 = vector.broadcast %cst_31 : f32 to vector<16x128xf32>
    %69 = arith.mulf %68, %67 : vector<16x128xf32>
    %cst_32 = arith.constant 0.707106769 : f32
    %70 = vector.broadcast %cst_32 : f32 to vector<16x128xf32>
    %71 = arith.mulf %67, %70 : vector<16x128xf32>
    %72 = math.erf %71 : vector<16x128xf32>
    %cst_33 = arith.constant 1.000000e+00 : f32
    %73 = vector.broadcast %cst_33 : f32 to vector<16x128xf32>
    %74 = arith.addf %73, %72 : vector<16x128xf32>
    %75 = arith.mulf %69, %74 : vector<16x128xf32>
    %76 = arith.truncf %75 : vector<16x128xf32> to vector<16x128xbf16>
    %c0_34 = arith.constant 0 : index
    %c0_35 = arith.constant 0 : index
    %77 = vector.load %arg10[%c0_34, %c0_35] : memref<128x128xbf16, #tpu.memory_space<vmem>>, vector<128x128xbf16>
    %cst_36 = arith.constant dense<0.000000e+00> : vector<16x128xf32>
    %78 = tpu.matmul %76, %77, %cst_36 {dimension_numbers = #tpu.dot_dimension_numbers<[1], [0], [0], [1], [0, 0, 1, 1], [], []>} : vector<16x128xbf16>, vector<128x128xbf16>, vector<16x128xf32> -> vector<16x128xf32>
    %c0_37 = arith.constant 0 : index
    %c0_38 = arith.constant 0 : index
    %79 = vector.load %arg11[%c0_37, %c0_38] : memref<1x128xf32, #tpu.memory_space<vmem>>, vector<1x128xf32>
    %80 = vector.broadcast %79 : vector<1x128xf32> to vector<16x128xf32>
    %81 = arith.addf %78, %80 : vector<16x128xf32>
    %82 = arith.truncf %81 : vector<16x128xf32> to vector<16x128xbf16>
    %c0_39 = arith.constant 0 : index
    %c0_40 = arith.constant 0 : index
    %83 = vector.load %arg12[%c0_39, %c0_40] : memref<128x128xbf16, #tpu.memory_space<vmem>>, vector<128x128xbf16>
    %cst_41 = arith.constant dense<0.000000e+00> : vector<16x128xf32>
    %84 = tpu.matmul %82, %83, %cst_41 {dimension_numbers = #tpu.dot_dimension_numbers<[1], [0], [0], [1], [0, 0, 1, 1], [], []>} : vector<16x128xbf16>, vector<128x128xbf16>, vector<16x128xf32> -> vector<16x128xf32>
    %c0_42 = arith.constant 0 : index
    %c0_43 = arith.constant 0 : index
    %85 = vector.load %arg13[%c0_42, %c0_43] : memref<1x128xf32, #tpu.memory_space<vmem>>, vector<1x128xf32>
    %86 = vector.broadcast %85 : vector<1x128xf32> to vector<16x128xf32>
    %87 = arith.addf %84, %86 : vector<16x128xf32>
    %c0_44 = arith.constant 0 : index
    %c0_45 = arith.constant 0 : index
    %88 = vector.load %arg14[%c0_44, %c0_45] : memref<16x128xf32, #tpu.memory_space<vmem>>, vector<16x128xf32>
    tpu.vector_store %arg14[%c0_44, %c0_45], %87 {strides = array<i32>} : memref<16x128xf32, #tpu.memory_space<vmem>>, vector<16x128xf32>,
    return
  }
  func.func @transform_0(%arg0: i32) -> (i32, i32) {
    %c0_i32 = arith.constant 0 : i32
    %c0_i32_0 = arith.constant 0 : i32
    return %arg0, %c0_i32 : i32, i32
  }
  func.func @transform_1(%arg0: i32) -> (i32, i32) {
    %c0_i32 = arith.constant 0 : i32
    %c0_i32_0 = arith.constant 0 : i32
    %c0_i32_1 = arith.constant 0 : i32
    return %c0_i32, %c0_i32_0 : i32, i32
  }
  func.func @transform_2(%arg0: i32) -> (i32, i32) {
    %c0_i32 = arith.constant 0 : i32
    %c0_i32_0 = arith.constant 0 : i32
    %c0_i32_1 = arith.constant 0 : i32
    return %c0_i32, %c0_i32_0 : i32, i32
  }
  func.func @transform_3(%arg0: i32) -> (i32, i32) {
    %c0_i32 = arith.constant 0 : i32
    %c0_i32_0 = arith.constant 0 : i32
    %c0_i32_1 = arith.constant 0 : i32
    return %c0_i32, %c0_i32_0 : i32, i32
  }
  func.func @transform_4(%arg0: i32) -> (i32, i32) {
    %c0_i32 = arith.constant 0 : i32
    %c0_i32_0 = arith.constant 0 : i32
    %c0_i32_1 = arith.constant 0 : i32
    return %c0_i32, %c0_i32_0 : i32, i32
  }
  func.func @transform_5(%arg0: i32) -> (i32, i32) {
    %c0_i32 = arith.constant 0 : i32
    %c0_i32_0 = arith.constant 0 : i32
    %c0_i32_1 = arith.constant 0 : i32
    return %c0_i32, %c0_i32_0 : i32, i32
  }
  func.func @transform_6(%arg0: i32) -> (i32, i32) {
    %c0_i32 = arith.constant 0 : i32
    %c0_i32_0 = arith.constant 0 : i32
    %c0_i32_1 = arith.constant 0 : i32
    return %c0_i32, %c0_i32_0 : i32, i32
  }
  func.func @transform_7(%arg0: i32) -> (i32, i32) {
    %c0_i32 = arith.constant 0 : i32
    %c0_i32_0 = arith.constant 0 : i32
    %c0_i32_1 = arith.constant 0 : i32
    return %c0_i32, %c0_i32_0 : i32, i32
  }
  func.func @transform_8(%arg0: i32) -> (i32, i32) {
    %c0_i32 = arith.constant 0 : i32
    %c0_i32_0 = arith.constant 0 : i32
    %c0_i32_1 = arith.constant 0 : i32
    return %c0_i32, %c0_i32_0 : i32, i32
  }
  func.func @transform_9(%arg0: i32) -> (i32, i32) {
    %c0_i32 = arith.constant 0 : i32
    %c0_i32_0 = arith.constant 0 : i32
    %c0_i32_1 = arith.constant 0 : i32
    return %c0_i32, %c0_i32_0 : i32, i32
  }
  func.func @transform_10(%arg0: i32) -> (i32, i32) {
    %c0_i32 = arith.constant 0 : i32
    %c0_i32_0 = arith.constant 0 : i32
    %c0_i32_1 = arith.constant 0 : i32
    return %c0_i32, %c0_i32_0 : i32, i32
  }
  func.func @transform_11(%arg0: i32) -> (i32, i32) {
    %c0_i32 = arith.constant 0 : i32
    %c0_i32_0 = arith.constant 0 : i32
    %c0_i32_1 = arith.constant 0 : i32
    return %c0_i32, %c0_i32_0 : i32, i32
  }
  func.func @transform_12(%arg0: i32) -> (i32, i32) {
    %c0_i32 = arith.constant 0 : i32
    %c0_i32_0 = arith.constant 0 : i32
    %c0_i32_1 = arith.constant 0 : i32
    return %c0_i32, %c0_i32_0 : i32, i32
  }
  func.func @transform_13(%arg0: i32) -> (i32, i32) {
    %c0_i32 = arith.constant 0 : i32
    %c0_i32_0 = arith.constant 0 : i32
    return %arg0, %c0_i32 : i32, i32
  }
}

module attributes {stable_mosaic.version = 11 : i64} {
  func.func @kernel(%arg0: i32, %arg1: memref<16x128xbf16, #tpu.memory_space<vmem>>, %arg2: memref<128x128xbf16, #tpu.memory_space<vmem>>, %arg3: memref<1x128xf32, #tpu.memory_space<vmem>>, %arg4: memref<1x128xf32, #tpu.memory_space<vmem>>, %arg5: memref<1x128xf32, #tpu.memory_space<vmem>>, %arg6: memref<128x128xbf16, #tpu.memory_space<vmem>>, %arg7: memref<1x128xf32, #tpu.memory_space<vmem>>, %arg8: memref<1x128xf32, #tpu.memory_space<vmem>>, %arg9: memref<1x128xf32, #tpu.memory_space<vmem>>, %arg10: memref<128x128xbf16, #tpu.memory_space<vmem>>, %arg11: memref<1x128xf32, #tpu.memory_space<vmem>>, %arg12: memref<128x128xbf16, #tpu.memory_space<vmem>>, %arg13: memref<1x128xf32, #tpu.memory_space<vmem>>, %arg14: memref<16x128xf32, #tpu.memory_space<vmem>>) attributes {dimension_semantics = [#tpu.dimension_semantics<parallel>], iteration_bounds = array<i64: 1>, scalar_prefetch = 0 : i64, scratch_operands = 0 : i64, tpu.core_type = #tpu.core_type<tc>, window_params = [{transform_indices = @transform_0, window_bounds = array<i64: 16, 128>}, {pipeline_mode = #tpu.pipeline_mode<synchronous>, transform_indices = @transform_1, window_bounds = array<i64: 128, 128>}, {pipeline_mode = #tpu.pipeline_mode<synchronous>, transform_indices = @transform_2, window_bounds = array<i64: 1, 128>}, {pipeline_mode = #tpu.pipeline_mode<synchronous>, transform_indices = @transform_3, window_bounds = array<i64: 1, 128>}, {pipeline_mode = #tpu.pipeline_mode<synchronous>, transform_indices = @transform_4, window_bounds = array<i64: 1, 128>}, {pipeline_mode = #tpu.pipeline_mode<synchronous>, transform_indices = @transform_5, window_bounds = array<i64: 128, 128>}, {pipeline_mode = #tpu.pipeline_mode<synchronous>, transform_indices = @transform_6, window_bounds = array<i64: 1, 128>}, {pipeline_mode = #tpu.pipeline_mode<synchronous>, transform_indices = @transform_7, window_bounds = array<i64: 1, 128>}, {pipeline_mode = #tpu.pipeline_mode<synchronous>, transform_indices = @transform_8, window_bounds = array<i64: 1, 128>}, {pipeline_mode = #tpu.pipeline_mode<synchronous>, transform_indices = @transform_9, window_bounds = array<i64: 128, 128>}, {pipeline_mode = #tpu.pipeline_mode<synchronous>, transform_indices = @transform_10, window_bounds = array<i64: 1, 128>}, {pipeline_mode = #tpu.pipeline_mode<synchronous>, transform_indices = @transform_11, window_bounds = array<i64: 128, 128>}, {pipeline_mode = #tpu.pipeline_mode<synchronous>, transform_indices = @transform_12, window_bounds = array<i64: 1, 128>}, {transform_indices = @transform_13, window_bounds = array<i64: 16, 128>}]} {
    %c0 = arith.constant 0 : index
    %c0_0 = arith.constant 0 : index
    %0 = vector.load %arg1[%c0, %c0_0] : memref<16x128xbf16, #tpu.memory_space<vmem>>, vector<16x128xbf16>
    %c0_1 = arith.constant 0 : index
    %c0_2 = arith.constant 0 : index
    %1 = vector.load %arg2[%c0_1, %c0_2] : memref<128x128xbf16, #tpu.memory_space<vmem>>, vector<128x128xbf16>
    %cst = arith.constant dense<0.000000e+00> : vector<16x128xf32>
    %2 = tpu.matmul %0, %1, %cst {dimension_numbers = #tpu.dot_dimension_numbers<[1], [0], [0], [1], [0, 0, 1, 1], [], []>} : vector<16x128xbf16>, vector<128x128xbf16>, vector<16x128xf32> -> vector<16x128xf32>
    %c0_3 = arith.constant 0 : index
    %c0_4 = arith.constant 0 : index
    %3 = vector.load %arg3[%c0_3, %c0_4] : memref<1x128xf32, #tpu.memory_space<vmem>>, vector<1x128xf32>
    %4 = vector.broadcast %3 : vector<1x128xf32> to vector<16x128xf32>
    %5 = arith.addf %2, %4 : vector<16x128xf32>
    %cst_5 = arith.constant dense<0.000000e+00> : vector<16xf32>
    %6 = vector.multi_reduction <add>, %5, %cst_5 [1] : vector<16x128xf32> to vector<16xf32>
    %7 = vector.shape_cast %6 : vector<16xf32> to vector<16x1xf32>
    %cst_6 = arith.constant 3.125000e-02 : f32
    %8 = vector.broadcast %cst_6 : f32 to vector<16x1xf32>
    %9 = arith.mulf %7, %8 : vector<16x1xf32>
    %10 = arith.mulf %5, %5 : vector<16x128xf32>
    %cst_7 = arith.constant dense<0.000000e+00> : vector<16xf32>
    %11 = vector.multi_reduction <add>, %10, %cst_7 [1] : vector<16x128xf32> to vector<16xf32>
    %12 = vector.shape_cast %11 : vector<16xf32> to vector<16x1xf32>
    %cst_8 = arith.constant 3.125000e-02 : f32
    %13 = vector.broadcast %cst_8 : f32 to vector<16x1xf32>
    %14 = arith.mulf %12, %13 : vector<16x1xf32>
    %15 = arith.mulf %9, %9 : vector<16x1xf32>
    %16 = arith.subf %14, %15 : vector<16x1xf32>
    %17 = vector.broadcast %9 : vector<16x1xf32> to vector<16x128xf32>
    %18 = arith.subf %5, %17 : vector<16x128xf32>
    %cst_9 = arith.constant 9.99999974E-6 : f32
    %19 = vector.broadcast %cst_9 : f32 to vector<16x1xf32>
    %20 = arith.addf %16, %19 : vector<16x1xf32>
    %21 = math.rsqrt %20 : vector<16x1xf32>
    %22 = vector.broadcast %21 : vector<16x1xf32> to vector<16x128xf32>
    %23 = arith.mulf %18, %22 : vector<16x128xf32>
    %c0_10 = arith.constant 0 : index
    %c0_11 = arith.constant 0 : index
    %24 = vector.load %arg4[%c0_10, %c0_11] : memref<1x128xf32, #tpu.memory_space<vmem>>, vector<1x128xf32>
    %25 = vector.broadcast %24 : vector<1x128xf32> to vector<16x128xf32>
    %26 = arith.mulf %23, %25 : vector<16x128xf32>
    %c0_12 = arith.constant 0 : index
    %c0_13 = arith.constant 0 : index
    %27 = vector.load %arg5[%c0_12, %c0_13] : memref<1x128xf32, #tpu.memory_space<vmem>>, vector<1x128xf32>
    %28 = vector.broadcast %27 : vector<1x128xf32> to vector<16x128xf32>
    %29 = arith.addf %26, %28 : vector<16x128xf32>
    %cst_14 = arith.constant 5.000000e-01 : f32
    %30 = vector.broadcast %cst_14 : f32 to vector<16x128xf32>
    %31 = arith.mulf %30, %29 : vector<16x128xf32>
    %cst_15 = arith.constant 0.707106769 : f32
    %32 = vector.broadcast %cst_15 : f32 to vector<16x128xf32>
    %33 = arith.mulf %29, %32 : vector<16x128xf32>
    %34 = math.erf %33 : vector<16x128xf32>
    %cst_16 = arith.constant 1.000000e+00 : f32
    %35 = vector.broadcast %cst_16 : f32 to vector<16x128xf32>
    %36 = arith.addf %35, %34 : vector<16x128xf32>
    %37 = arith.mulf %31, %36 : vector<16x128xf32>
    %38 = arith.truncf %37 : vector<16x128xf32> to vector<16x128xbf16>
    %c0_17 = arith.constant 0 : index
    %c0_18 = arith.constant 0 : index
    %39 = vector.load %arg6[%c0_17, %c0_18] : memref<128x128xbf16, #tpu.memory_space<vmem>>, vector<128x128xbf16>
    %cst_19 = arith.constant dense<0.000000e+00> : vector<16x128xf32>
    %40 = tpu.matmul %38, %39, %cst_19 {dimension_numbers = #tpu.dot_dimension_numbers<[1], [0], [0], [1], [0, 0, 1, 1], [], []>} : vector<16x128xbf16>, vector<128x128xbf16>, vector<16x128xf32> -> vector<16x128xf32>
    %c0_20 = arith.constant 0 : index
    %c0_21 = arith.constant 0 : index
    %41 = vector.load %arg7[%c0_20, %c0_21] : memref<1x128xf32, #tpu.memory_space<vmem>>, vector<1x128xf32>
    %42 = vector.broadcast %41 : vector<1x128xf32> to vector<16x128xf32>
    %43 = arith.addf %40, %42 : vector<16x128xf32>
    %cst_22 = arith.constant dense<0.000000e+00> : vector<16xf32>
    %44 = vector.multi_reduction <add>, %43, %cst_22 [1] : vector<16x128xf32> to vector<16xf32>
    %45 = vector.shape_cast %44 : vector<16xf32> to vector<16x1xf32>
    %cst_23 = arith.constant 3.125000e-02 : f32
    %46 = vector.broadcast %cst_23 : f32 to vector<16x1xf32>
    %47 = arith.mulf %45, %46 : vector<16x1xf32>
    %48 = arith.mulf %43, %43 : vector<16x128xf32>
    %cst_24 = arith.constant dense<0.000000e+00> : vector<16xf32>
    %49 = vector.multi_reduction <add>, %48, %cst_24 [1] : vector<16x128xf32> to vector<16xf32>
    %50 = vector.shape_cast %49 : vector<16xf32> to vector<16x1xf32>
    %cst_25 = arith.constant 3.125000e-02 : f32
    %51 = vector.broadcast %cst_25 : f32 to vector<16x1xf32>
    %52 = arith.mulf %50, %51 : vector<16x1xf32>
    %53 = arith.mulf %47, %47 : vector<16x1xf32>
    %54 = arith.subf %52, %53 : vector<16x1xf32>
    %55 = vector.broadcast %47 : vector<16x1xf32> to vector<16x128xf32>
    %56 = arith.subf %43, %55 : vector<16x128xf32>
    %cst_26 = arith.constant 9.99999974E-6 : f32
    %57 = vector.broadcast %cst_26 : f32 to vector<16x1xf32>
    %58 = arith.addf %54, %57 : vector<16x1xf32>
    %59 = math.rsqrt %58 : vector<16x1xf32>
    %60 = vector.broadcast %59 : vector<16x1xf32> to vector<16x128xf32>
    %61 = arith.mulf %56, %60 : vector<16x128xf32>
    %c0_27 = arith.constant 0 : index
    %c0_28 = arith.constant 0 : index
    %62 = vector.load %arg8[%c0_27, %c0_28] : memref<1x128xf32, #tpu.memory_space<vmem>>, vector<1x128xf32>
    %63 = vector.broadcast %62 : vector<1x128xf32> to vector<16x128xf32>
    %64 = arith.mulf %61, %63 : vector<16x128xf32>
    %c0_29 = arith.constant 0 : index
    %c0_30 = arith.constant 0 : index
    %65 = vector.load %arg9[%c0_29, %c0_30] : memref<1x128xf32, #tpu.memory_space<vmem>>, vector<1x128xf32>
    %66 = vector.broadcast %65 : vector<1x128xf32> to vector<16x128xf32>
    %67 = arith.addf %64, %66 : vector<16x128xf32>
    %cst_31 = arith.constant 5.000000e-01 : f32
    %68 = vector.broadcast %cst_31 : f32 to vector<16x128xf32>
    %69 = arith.mulf %68, %67 : vector<16x128xf32>
    %cst_32 = arith.constant 0.707106769 : f32
    %70 = vector.broadcast %cst_32 : f32 to vector<16x128xf32>
    %71 = arith.mulf %67, %70 : vector<16x128xf32>
    %72 = math.erf %71 : vector<16x128xf32>
    %cst_33 = arith.constant 1.000000e+00 : f32
    %73 = vector.broadcast %cst_33 : f32 to vector<16x128xf32>
    %74 = arith.addf %73, %72 : vector<16x128xf32>
    %75 = arith.mulf %69, %74 : vector<16x128xf32>
    %76 = arith.truncf %75 : vector<16x128xf32> to vector<16x128xbf16>
    %c0_34 = arith.constant 0 : index
    %c0_35 = arith.constant 0 : index
    %77 = vector.load %arg10[%c0_34, %c0_35] : memref<128x128xbf16, #tpu.memory_space<vmem>>, vector<128x128xbf16>
    %cst_36 = arith.constant dense<0.000000e+00> : vector<16x128xf32>
    %78 = tpu.matmul %76, %77, %cst_36 {dimension_numbers = #tpu.dot_dimension_numbers<[1], [0], [0], [1], [0, 0, 1, 1], [], []>} : vector<16x128xbf16>, vector<128x128xbf16>, vector<16x128xf32> -> vector<16x128xf32>
    %c0_37 = arith.constant 0 : index
    %c0_38 = arith.constant 0 : index
    %79 = vector.load %arg11[%c0_37, %c0_38] : memref<1x128xf32, #tpu.memory_space<vmem>>, vector<1x128xf32>
    %80 = vector.broadcast %79 : vector<1x128xf32> to vector<16x128xf32>
    %81 = arith.addf %78, %80 : vector<16x128xf32>
    %82 = arith.truncf %81 : vector<16x128xf32> to vector<16x128xbf16>
    %c0_39 = arith.constant 0 : index
    %c0_40 = arith.constant 0 : index
    %83 = vector.load %arg12[%c0_39, %c0_40] : memref<128x128xbf16, #tpu.memory_space<vmem>>, vector<128x128xbf16>
    %cst_41 = arith.constant dense<0.000000e+00> : vector<16x128xf32>
    %84 = tpu.matmul %82, %83, %cst_41 {dimension_numbers = #tpu.dot_dimension_numbers<[1], [0], [0], [1], [0, 0, 1, 1], [], []>} : vector<16x128xbf16>, vector<128x128xbf16>, vector<16x128xf32> -> vector<16x128xf32>
    %c0_42 = arith.constant 0 : index
    %c0_43 = arith.constant 0 : index
    %85 = vector.load %arg13[%c0_42, %c0_43] : memref<1x128xf32, #tpu.memory_space<vmem>>, vector<1x128xf32>
    %86 = vector.broadcast %85 : vector<1x128xf32> to vector<16x128xf32>
    %87 = arith.addf %84, %86 : vector<16x128xf32>
    %c0_44 = arith.constant 0 : index
    %c0_45 = arith.constant 0 : index
    %88 = vector.load %arg14[%c0_44, %c0_45] : memref<16x128xf32, #tpu.memory_space<vmem>>, vector<16x128xf32>
    tpu.vector_store %arg14[%c0_44, %c0_45], %87 {strides = array<i32>} : memref<16x128xf32, #tpu.memory_space<vmem>>, vector<16x128xf32>,
    return
  }
  func.func @transform_0(%arg0: i32) -> (i32, i32) {
    %c0_i32 = arith.constant 0 : i32
    %c0_i32_0 = arith.constant 0 : i32
    return %arg0, %c0_i32 : i32, i32
  }
  func.func @transform_1(%arg0: i32) -> (i32, i32) {
    %c0_i32 = arith.constant 0 : i32
    %c0_i32_0 = arith.constant 0 : i32
    %c0_i32_1 = arith.constant 0 : i32
    return %c0_i32, %c0_i32_0 : i32, i32
  }
  func.func @transform_2(%arg0: i32) -> (i32, i32) {
    %c0_i32 = arith.constant 0 : i32
    %c0_i32_0 = arith.constant 0 : i32
    %c0_i32_1 = arith.constant 0 : i32
    return %c0_i32, %c0_i32_0 : i32, i32
  }
  func.func @transform_3(%arg0: i32) -> (i32, i32) {
    %c0_i32 = arith.constant 0 : i32
    %c0_i32_0 = arith.constant 0 : i32
    %c0_i32_1 = arith.constant 0 : i32
    return %c0_i32, %c0_i32_0 : i32, i32
  }
  func.func @transform_4(%arg0: i32) -> (i32, i32) {
    %c0_i32 = arith.constant 0 : i32
    %c0_i32_0 = arith.constant 0 : i32
    %c0_i32_1 = arith.constant 0 : i32
    return %c0_i32, %c0_i32_0 : i32, i32
  }
  func.func @transform_5(%arg0: i32) -> (i32, i32) {
    %c0_i32 = arith.constant 0 : i32
    %c0_i32_0 = arith.constant 0 : i32
    %c0_i32_1 = arith.constant 0 : i32
    return %c0_i32, %c0_i32_0 : i32, i32
  }
  func.func @transform_6(%arg0: i32) -> (i32, i32) {
    %c0_i32 = arith.constant 0 : i32
    %c0_i32_0 = arith.constant 0 : i32
    %c0_i32_1 = arith.constant 0 : i32
    return %c0_i32, %c0_i32_0 : i32, i32
  }
  func.func @transform_7(%arg0: i32) -> (i32, i32) {
    %c0_i32 = arith.constant 0 : i32
    %c0_i32_0 = arith.constant 0 : i32
    %c0_i32_1 = arith.constant 0 : i32
    return %c0_i32, %c0_i32_0 : i32, i32
  }
  func.func @transform_8(%arg0: i32) -> (i32, i32) {
    %c0_i32 = arith.constant 0 : i32
    %c0_i32_0 = arith.constant 0 : i32
    %c0_i32_1 = arith.constant 0 : i32
    return %c0_i32, %c0_i32_0 : i32, i32
  }
  func.func @transform_9(%arg0: i32) -> (i32, i32) {
    %c0_i32 = arith.constant 0 : i32
    %c0_i32_0 = arith.constant 0 : i32
    %c0_i32_1 = arith.constant 0 : i32
    return %c0_i32, %c0_i32_0 : i32, i32
  }
  func.func @transform_10(%arg0: i32) -> (i32, i32) {
    %c0_i32 = arith.constant 0 : i32
    %c0_i32_0 = arith.constant 0 : i32
    %c0_i32_1 = arith.constant 0 : i32
    return %c0_i32, %c0_i32_0 : i32, i32
  }
  func.func @transform_11(%arg0: i32) -> (i32, i32) {
    %c0_i32 = arith.constant 0 : i32
    %c0_i32_0 = arith.constant 0 : i32
    %c0_i32_1 = arith.constant 0 : i32
    return %c0_i32, %c0_i32_0 : i32, i32
  }
  func.func @transform_12(%arg0: i32) -> (i32, i32) {
    %c0_i32 = arith.constant 0 : i32
    %c0_i32_0 = arith.constant 0 : i32
    %c0_i32_1 = arith.constant 0 : i32
    return %c0_i32, %c0_i32_0 : i32, i32
  }
  func.func @transform_13(%arg0: i32) -> (i32, i32) {
    %c0_i32 = arith.constant 0 : i32
    %c0_i32_0 = arith.constant 0 : i32
    return %arg0, %c0_i32 : i32, i32
  }
}

</mosaic_0001>

<llo_original>
// kernel: tpu_custom_call.1
$region0: #{tpu_custom_call.1}
  #allocation0 [shape = 'u32[]', space=smem, size = 0x4, offset = 0x4, fixed_abs, tag = 'smem constant byte address 0x4 - core index']
  #allocation1 [shape = 'u32[144,128]{1,0:T(1,128)}', space=vmem, size = 0x12000, scoped, tag = 'internal scratch']
  %s0 = inlined_call_operand.hbm [shape: bf16[16,128], index: 0, kind: input, shape index: {}]
  %s1 = inlined_call_operand.hbm [shape: bf16[128,128], index: 1, kind: input, shape index: {}]
  %s2 = inlined_call_operand.vmem [shape: f32[1,128], index: 2, kind: input, shape index: {}]
  %s3 = inlined_call_operand.vmem [shape: f32[1,128], index: 3, kind: input, shape index: {}]
  %s4 = inlined_call_operand.vmem [shape: f32[1,128], index: 4, kind: input, shape index: {}]
  %s5 = inlined_call_operand.hbm [shape: bf16[128,128], index: 5, kind: input, shape index: {}]
  %s6 = inlined_call_operand.vmem [shape: f32[1,128], index: 6, kind: input, shape index: {}]
  %s7 = inlined_call_operand.vmem [shape: f32[1,128], index: 7, kind: input, shape index: {}]
  %s8 = inlined_call_operand.vmem [shape: f32[1,128], index: 8, kind: input, shape index: {}]
  %s9 = inlined_call_operand.hbm [shape: bf16[128,128], index: 9, kind: input, shape index: {}]
  %s10 = inlined_call_operand.vmem [shape: f32[1,128], index: 10, kind: input, shape index: {}]
  %s11 = inlined_call_operand.hbm [shape: bf16[128,128], index: 11, kind: input, shape index: {}]
  %s12 = inlined_call_operand.vmem [shape: f32[1,128], index: 12, kind: input, shape index: {}]
  %s13 = inlined_call_operand.hbm [shape: f32[16,128], index: 13, kind: output, shape index: {}]
  %s14 = sld [smem:[#allocation0]]
  $region82: #{tpu_custom_call.1} parent=0
    _
  %s16 = ssub.s32 1, %s14
  %s17 = scalar_select 0, %s16, %s14
  $region1: #{tpu_custom_call.1} parent=0
    #allocation2 [shape = 'u8[4096]{0}', space=vmem, size = 0x1000, scoped, tag = 'input window, operand 0, single buffered']
    #allocation3 [shape = 's32[1]{0}', space=sflag, size = 0x4, scoped, tag = 'scoped memory for tpu_custom_call.1']
    #allocation4 [shape = 's32[1]{0}', space=sflag, size = 0x4, scoped, tag = 'scoped memory for tpu_custom_call.1']
    #allocation5 [shape = 'u8[32768]{0}', space=vmem, size = 0x8000, scoped, tag = 'input window, operand 1, single buffered']
    #allocation6 [shape = 's32[1]{0}', space=sflag, size = 0x4, scoped, tag = 'scoped memory for tpu_custom_call.1']
    #allocation7 [shape = 'u8[32768]{0}', space=vmem, size = 0x8000, scoped, tag = 'input window, operand 5, single buffered']
    #allocation8 [shape = 'u8[32768]{0}', space=vmem, size = 0x8000, scoped, tag = 'input window, operand 9, single buffered']
    #allocation9 [shape = 's32[1]{0}', space=sflag, size = 0x4, scoped, tag = 'scoped memory for tpu_custom_call.1']
    #allocation10 [shape = 'u8[32768]{0}', space=vmem, size = 0x8000, scoped, tag = 'input window, operand 11, single buffered']
    #allocation11 [shape = 'u8[8192]{0}', space=vmem, size = 0x2000, scoped, tag = 'output window, operand 0, single buffered']
    %18 = vsyncpa [#allocation3], 0
    %19 = vsyncpa [#allocation6], 0
    %20 = vsyncpa [#allocation9], 0
    %21 = vsyncpa [#allocation4], 0
    // Predicated region
    $region2: #{tpu_custom_call.1} parent=1 // pred_check
      _
    $region3: #{tpu_custom_call.1} parent=1 // pred_check_branch
      %23 = sbr.rel (0) target = $region5
    $region4: #{tpu_custom_call.1} parent=1 // pred_region
      %s25 = ssub.s32 128, 128
      %26 = vsyncadd [#allocation3], %s25
      %s27 = sshll.u32 [#allocation2], 4
      %s28 = int_to_ptr.vmem [resolvable:$true] %s27
      %33 = dma.hbm_to_vmem [thread:$0]  %s0, 128, %s28, [#allocation3], 64, 64, 4
    $region5: #{tpu_custom_call.1} parent=1 // pred_fallthru
      _
    // Predicated region
    $region6: #{tpu_custom_call.1} parent=1 // pred_check
      _
    $region7: #{tpu_custom_call.1} parent=1 // pred_check_branch
      %35 = sbr.rel (0) target = $region9
    $region8: #{tpu_custom_call.1} parent=1 // pred_region
      %s37 = ssub.s32 1024, 1024
      %38 = vsyncadd [#allocation6], %s37
      %s39 = sshll.u32 [#allocation5], 4
      %s40 = int_to_ptr.vmem [resolvable:$true] %s39
      %45 = dma.hbm_to_vmem [thread:$0]  %s1, 1024, %s40, [#allocation6], 64, 64, 4
    $region9: #{tpu_custom_call.1} parent=1 // pred_fallthru
      _
    // Predicated region
    $region10: #{tpu_custom_call.1} parent=1 // pred_check
      _
    $region11: #{tpu_custom_call.1} parent=1 // pred_check_branch
      %47 = sbr.rel (0) target = $region13
    $region12: #{tpu_custom_call.1} parent=1 // pred_region
      _
    $region13: #{tpu_custom_call.1} parent=1 // pred_fallthru
      _
    // Predicated region
    $region14: #{tpu_custom_call.1} parent=1 // pred_check
      _
    $region15: #{tpu_custom_call.1} parent=1 // pred_check_branch
      %49 = sbr.rel (0) target = $region17
    $region16: #{tpu_custom_call.1} parent=1 // pred_region
      _
    $region17: #{tpu_custom_call.1} parent=1 // pred_fallthru
      _
    // Predicated region
    $region18: #{tpu_custom_call.1} parent=1 // pred_check
      _
    $region19: #{tpu_custom_call.1} parent=1 // pred_check_branch
      %51 = sbr.rel (0) target = $region21
    $region20: #{tpu_custom_call.1} parent=1 // pred_region
      _
    $region21: #{tpu_custom_call.1} parent=1 // pred_fallthru
      _
    // Predicated region
    $region22: #{tpu_custom_call.1} parent=1 // pred_check
      _
    $region23: #{tpu_custom_call.1} parent=1 // pred_check_branch
      %53 = sbr.rel (0) target = $region25
    $region24: #{tpu_custom_call.1} parent=1 // pred_region
      %s55 = ssub.s32 1024, 1024
      %56 = vsyncadd [#allocation6], %s55
      %s57 = sshll.u32 [#allocation7], 4
      %s58 = int_to_ptr.vmem [resolvable:$true] %s57
      %63 = dma.hbm_to_vmem [thread:$0]  %s5, 1024, %s58, [#allocation6], 64, 64, 4
    $region25: #{tpu_custom_call.1} parent=1 // pred_fallthru
      _
    // Predicated region
    $region26: #{tpu_custom_call.1} parent=1 // pred_check
      _
    $region27: #{tpu_custom_call.1} parent=1 // pred_check_branch
      %65 = sbr.rel (0) target = $region29
    $region28: #{tpu_custom_call.1} parent=1 // pred_region
      _
    $region29: #{tpu_custom_call.1} parent=1 // pred_fallthru
      _
    // Predicated region
    $region30: #{tpu_custom_call.1} parent=1 // pred_check
      _
    $region31: #{tpu_custom_call.1} parent=1 // pred_check_branch
      %67 = sbr.rel (0) target = $region33
    $region32: #{tpu_custom_call.1} parent=1 // pred_region
      _
    $region33: #{tpu_custom_call.1} parent=1 // pred_fallthru
      _
    // Predicated region
    $region34: #{tpu_custom_call.1} parent=1 // pred_check
      _
    $region35: #{tpu_custom_call.1} parent=1 // pred_check_branch
      %69 = sbr.rel (0) target = $region37
    $region36: #{tpu_custom_call.1} parent=1 // pred_region
      _
    $region37: #{tpu_custom_call.1} parent=1 // pred_fallthru
      _
    // Predicated region
    $region38: #{tpu_custom_call.1} parent=1 // pred_check
      _
    $region39: #{tpu_custom_call.1} parent=1 // pred_check_branch
      %71 = sbr.rel (0) target = $region41
    $region40: #{tpu_custom_call.1} parent=1 // pred_region
      %s73 = ssub.s32 1024, 1024
      %74 = vsyncadd [#allocation9], %s73
      %s75 = sshll.u32 [#allocation8], 4
      %s76 = int_to_ptr.vmem [resolvable:$true] %s75
      %81 = dma.hbm_to_vmem [thread:$0]  %s9, 1024, %s76, [#allocation9], 64, 64, 4
    $region41: #{tpu_custom_call.1} parent=1 // pred_fallthru
      _
    // Predicated region
    $region42: #{tpu_custom_call.1} parent=1 // pred_check
      _
    $region43: #{tpu_custom_call.1} parent=1 // pred_check_branch
      %83 = sbr.rel (0) target = $region45
    $region44: #{tpu_custom_call.1} parent=1 // pred_region
      _
    $region45: #{tpu_custom_call.1} parent=1 // pred_fallthru
      _
    // Predicated region
    $region46: #{tpu_custom_call.1} parent=1 // pred_check
      _
    $region47: #{tpu_custom_call.1} parent=1 // pred_check_branch
      %85 = sbr.rel (0) target = $region49
    $region48: #{tpu_custom_call.1} parent=1 // pred_region
      %s87 = ssub.s32 1024, 1024
      %88 = vsyncadd [#allocation9], %s87
      %s89 = sshll.u32 [#allocation10], 4
      %s90 = int_to_ptr.vmem [resolvable:$true] %s89
      %95 = dma.hbm_to_vmem [thread:$0]  %s11, 1024, %s90, [#allocation9], 64, 64, 4
    $region49: #{tpu_custom_call.1} parent=1 // pred_fallthru
      _
    // Predicated region
    $region50: #{tpu_custom_call.1} parent=1 // pred_check
      _
    $region51: #{tpu_custom_call.1} parent=1 // pred_check_branch
      %97 = sbr.rel (0) target = $region53
    $region52: #{tpu_custom_call.1} parent=1 // pred_region
      _
    $region53: #{tpu_custom_call.1} parent=1 // pred_fallthru
      _
    // Predicated region
    $region54: #{tpu_custom_call.1} parent=1 // pred_check
      _
    $region55: #{tpu_custom_call.1} parent=1 // pred_check_branch
      %99 = sbr.rel (0) target = $region57
    $region56: #{tpu_custom_call.1} parent=1 // pred_region
      %100 = dma.done [#allocation3], 128
    $region57: #{tpu_custom_call.1} parent=1 // pred_fallthru
      _
    // Predicated region
    $region58: #{tpu_custom_call.1} parent=1 // pred_check
      _
    $region59: #{tpu_custom_call.1} parent=1 // pred_check_branch
      %102 = sbr.rel (0) target = $region61
    $region60: #{tpu_custom_call.1} parent=1 // pred_region
      %103 = dma.done [#allocation6], 1024
    $region61: #{tpu_custom_call.1} parent=1 // pred_fallthru
      _
    // Predicated region
    $region62: #{tpu_custom_call.1} parent=1 // pred_check
      _
    $region63: #{tpu_custom_call.1} parent=1 // pred_check_branch
      %105 = sbr.rel (0) target = $region65
    $region64: #{tpu_custom_call.1} parent=1 // pred_region
      %106 = dma.done [#allocation6], 1024
    $region65: #{tpu_custom_call.1} parent=1 // pred_fallthru
      _
    // Predicated region
    $region66: #{tpu_custom_call.1} parent=1 // pred_check
      _
    $region67: #{tpu_custom_call.1} parent=1 // pred_check_branch
      %108 = sbr.rel (0) target = $region69
    $region68: #{tpu_custom_call.1} parent=1 // pred_region
      %109 = dma.done [#allocation9], 1024
    $region69: #{tpu_custom_call.1} parent=1 // pred_fallthru
      _
    // Predicated region
    $region70: #{tpu_custom_call.1} parent=1 // pred_check
      _
    $region71: #{tpu_custom_call.1} parent=1 // pred_check_branch
      %111 = sbr.rel (0) target = $region73
    $region72: #{tpu_custom_call.1} parent=1 // pred_region
      %112 = dma.done [#allocation9], 1024
    $region73: #{tpu_custom_call.1} parent=1 // pred_fallthru
      _
    %v114 = vld [vmem:[#allocation2] sm:$0xf]
    %v115 = vld [vmem:[#allocation2 + $0x4] sm:$0xf]
    %v116 = vld [vmem:[#allocation5] sm:$0xf]
    %v117 = vld [vmem:[#allocation5 + $0x4] sm:$0xf]
    %v118 = vld [vmem:[#allocation5 + $0x8] sm:$0xf]
    %v119 = vld [vmem:[#allocation5 + $0xc] sm:$0xf]
    %v120 = vld [vmem:[#allocation5 + $0x10] sm:$0xf]
    %v121 = vld [vmem:[#allocation5 + $0x14] sm:$0xf]
    %v122 = vld [vmem:[#allocation5 + $0x18] sm:$0xf]
    %v123 = vld [vmem:[#allocation5 + $0x1c] sm:$0xf]
    %v124 = vld [vmem:[#allocation5 + $0x20] sm:$0xf]
    %v125 = vld [vmem:[#allocation5 + $0x24] sm:$0xf]
    %v126 = vld [vmem:[#allocation5 + $0x28] sm:$0xf]
    %v127 = vld [vmem:[#allocation5 + $0x2c] sm:$0xf]
    %v128 = vld [vmem:[#allocation5 + $0x30] sm:$0xf]
    %v129 = vld [vmem:[#allocation5 + $0x34] sm:$0xf]
    %v130 = vld [vmem:[#allocation5 + $0x38] sm:$0xf]
    %v131 = vld [vmem:[#allocation5 + $0x3c] sm:$0xf]
    %v132 = vld [vmem:[%s2] sm:$0x1]
    %v134 = vlaneseq
    %v135 = vshrl.u32 %v134, 7
    %v136 = vsub.s32 0, %v135
    %v137 = vrot.slane %v132, %v136
    %v141 = vunpack.c.l.b16 %v114
    %v142 = vunpack.c.l.b16 %v115
    %v143 = vpack.c.b16 %v142, %v141
    %v161 = vunpack.c.l.b16 %v116
    %v162 = vunpack.c.l.b16 %v117
    %v163 = vunpack.c.l.b16 %v118
    %v164 = vunpack.c.l.b16 %v119
    %v165 = vunpack.c.l.b16 %v120
    %v166 = vunpack.c.l.b16 %v121
    %v167 = vunpack.c.l.b16 %v122
    %v168 = vunpack.c.l.b16 %v123
    %v169 = vunpack.c.l.b16 %v124
    %v170 = vunpack.c.l.b16 %v125
    %v171 = vunpack.c.l.b16 %v126
    %v172 = vunpack.c.l.b16 %v127
    %v173 = vunpack.c.l.b16 %v128
    %v174 = vunpack.c.l.b16 %v129
    %v175 = vunpack.c.l.b16 %v130
    %v176 = vunpack.c.l.b16 %v131
    %v177 = vpack.c.b16 %v162, %v161
    %v178 = vpack.c.b16 %v164, %v163
    %v179 = vpack.c.b16 %v166, %v165
    %v180 = vpack.c.b16 %v168, %v167
    %v181 = vpack.c.b16 %v170, %v169
    %v182 = vpack.c.b16 %v172, %v171
    %v183 = vpack.c.b16 %v174, %v173
    %v184 = vpack.c.b16 %v176, %v175
    %193 = vmatprep.subr.bf16.mxu0 0
    %194 = vmatpush1.bf16.msra.mxu0 %v177
    %195 = vmatprep.subr.bf16.mxu0 0
    %196 = vmatpush1.bf16.msra.mxu0 %v178
    %197 = vmatprep.subr.bf16.mxu0 0
    %198 = vmatpush1.bf16.msra.mxu0 %v179
    %199 = vmatprep.subr.bf16.mxu0 0
    %200 = vmatpush1.bf16.msra.mxu0 %v180
    %201 = vmatprep.subr.bf16.mxu0 0
    %202 = vmatpush1.bf16.msra.mxu0 %v181
    %203 = vmatprep.subr.bf16.mxu0 0
    %204 = vmatpush1.bf16.msra.mxu0 %v182
    %205 = vmatprep.subr.bf16.mxu0 0
    %206 = vmatpush1.bf16.msra.mxu0 %v183
    %207 = vmatprep.subr.bf16.mxu0 0
    %208 = vmatpush1.bf16.msra.mxu0 %v184
    %209 = vmatprep.subr.bf16.mxu0 0
    %210 = vmatpush1.bf16.msra.mxu0 0
    %211 = vmatprep.subr.bf16.mxu0 0
    %212 = vmatpush1.bf16.msra.mxu0 0
    %213 = vmatprep.subr.bf16.mxu0 0
    %214 = vmatpush1.bf16.msra.mxu0 0
    %215 = vmatprep.subr.bf16.mxu0 0
    %216 = vmatpush1.bf16.msra.mxu0 0
    %217 = vmatprep.subr.bf16.mxu0 0
    %218 = vmatpush1.bf16.msra.mxu0 0
    %219 = vmatprep.subr.bf16.mxu0 0
    %220 = vmatpush1.bf16.msra.mxu0 0
    %221 = vmatprep.subr.bf16.mxu0 0
    %222 = vmatpush1.bf16.msra.mxu0 0
    %223 = vmatprep.subr.bf16.mxu0 0
    %224 = vmatpush1.bf16.msra.mxu0 0
    %225 = vmatprep.mubr.bf16.mxu0 0
    %226 = vmatmul.mubr.bf16.gmra.mrb[0].mxu0 %v143
    %v227 = vpop.f32.mrb[0].mxu0
    %v228 = vadd.f32 %v137, %v227
    %v229 = vpop.f32.mrb[0].mxu0
    %v230 = vpop.f32.mrb[0].mxu0
    %v231 = vadd.f32 %v137, %v230
    %v232 = vpop.f32.mrb[0].mxu0
    %233 = vdwg.mxu0
    %234 = vadd.xlane.f32.xlu0 %v228
    %v235 = vpop.xlane.xlu0 %234
    %236 = vadd.xlane.f32.xlu0 %v231
    %v237 = vpop.xlane.xlu0 %236
    %v238 = vmul.f32 %v235, 0.03125
    %v239 = vmul.f32 %v237, 0.03125
    %v240 = vmul.f32 %v228, %v228
    %v241 = vmul.f32 %v231, %v231
    %242 = vadd.xlane.f32.xlu0 %v240
    %v243 = vpop.xlane.xlu0 %242
    %244 = vadd.xlane.f32.xlu0 %v241
    %v245 = vpop.xlane.xlu0 %244
    %v246 = vmul.f32 %v243, 0.03125
    %v247 = vmul.f32 %v245, 0.03125
    %v248 = vmul.f32 %v238, %v238
    %v249 = vmul.f32 %v239, %v239
    %v250 = vsub.f32 %v246, %v248
    %v251 = vsub.f32 %v247, %v249
    %v252 = vsub.f32 %v228, %v238
    %v253 = vsub.f32 %v231, %v239
    %v254 = vadd.f32 %v250, 1e-05
    %v255 = vadd.f32 %v251, 1e-05
    %v256 = vrsqrt.pop %v254
    %v257 = vrsqrt.pop %v255
    %v258 = vmul.f32 %v252, %v256
    %v259 = vmul.f32 %v253, %v257
    %v260 = vld [vmem:[%s3] sm:$0x1]
    %v262 = vlaneseq
    %v263 = vshrl.u32 %v262, 7
    %v264 = vsub.s32 0, %v263
    %v265 = vrot.slane %v260, %v264
    %v267 = vmul.f32 %v258, %v265
    %v268 = vmul.f32 %v259, %v265
    %v269 = vld [vmem:[%s4] sm:$0x1]
    %v271 = vlaneseq
    %v272 = vshrl.u32 %v271, 7
    %v273 = vsub.s32 0, %v272
    %v274 = vrot.slane %v269, %v273
    %v276 = vadd.f32 %v267, %v274
    %v277 = vadd.f32 %v268, %v274
    %v278 = vmul.f32 %v276, 0.5
    %v279 = vmul.f32 %v277, 0.5
    %v280 = vmul.f32 %v276, 0.70710677
    %v281 = vmul.f32 %v277, 0.70710677
    %v282 = verf.f32.pop %v280
    %v283 = verf.f32.pop %v281
    %v284 = vadd.f32 %v282, 1.0
    %v285 = vadd.f32 %v283, 1.0
    %v286 = vmul.f32 %v278, %v284
    %v287 = vmul.f32 %v279, %v285
    %v288 = vpack.c.bf16 %v287, %v286
    %v289 = vld [vmem:[#allocation7] sm:$0xf]
    %v290 = vld [vmem:[#allocation7 + $0x4] sm:$0xf]
    %v291 = vld [vmem:[#allocation7 + $0x8] sm:$0xf]
    %v292 = vld [vmem:[#allocation7 + $0xc] sm:$0xf]
    %v293 = vld [vmem:[#allocation7 + $0x10] sm:$0xf]
    %v294 = vld [vmem:[#allocation7 + $0x14] sm:$0xf]
    %v295 = vld [vmem:[#allocation7 + $0x18] sm:$0xf]
    %v296 = vld [vmem:[#allocation7 + $0x1c] sm:$0xf]
    %v297 = vld [vmem:[#allocation7 + $0x20] sm:$0xf]
    %v298 = vld [vmem:[#allocation7 + $0x24] sm:$0xf]
    %v299 = vld [vmem:[#allocation7 + $0x28] sm:$0xf]
    %v300 = vld [vmem:[#allocation7 + $0x2c] sm:$0xf]
    %v301 = vld [vmem:[#allocation7 + $0x30] sm:$0xf]
    %v302 = vld [vmem:[#allocation7 + $0x34] sm:$0xf]
    %v303 = vld [vmem:[#allocation7 + $0x38] sm:$0xf]
    %v304 = vld [vmem:[#allocation7 + $0x3c] sm:$0xf]
    %v305 = vld [vmem:[%s6] sm:$0x1]
    %v307 = vlaneseq
    %v308 = vshrl.u32 %v307, 7
    %v309 = vsub.s32 0, %v308
    %v310 = vrot.slane %v305, %v309
    %v328 = vunpack.c.l.b16 %v289
    %v329 = vunpack.c.l.b16 %v290
    %v330 = vunpack.c.l.b16 %v291
    %v331 = vunpack.c.l.b16 %v292
    %v332 = vunpack.c.l.b16 %v293
    %v333 = vunpack.c.l.b16 %v294
    %v334 = vunpack.c.l.b16 %v295
    %v335 = vunpack.c.l.b16 %v296
    %v336 = vunpack.c.l.b16 %v297
    %v337 = vunpack.c.l.b16 %v298
    %v338 = vunpack.c.l.b16 %v299
    %v339 = vunpack.c.l.b16 %v300
    %v340 = vunpack.c.l.b16 %v301
    %v341 = vunpack.c.l.b16 %v302
    %v342 = vunpack.c.l.b16 %v303
    %v343 = vunpack.c.l.b16 %v304
    %v344 = vpack.c.b16 %v329, %v328
    %v345 = vpack.c.b16 %v331, %v330
    %v346 = vpack.c.b16 %v333, %v332
    %v347 = vpack.c.b16 %v335, %v334
    %v348 = vpack.c.b16 %v337, %v336
    %v349 = vpack.c.b16 %v339, %v338
    %v350 = vpack.c.b16 %v341, %v340
    %v351 = vpack.c.b16 %v343, %v342
    %360 = vmatprep.subr.bf16.mxu0 0
    %361 = vmatpush1.bf16.msra.mxu0 %v344
    %362 = vmatprep.subr.bf16.mxu0 0
    %363 = vmatpush1.bf16.msra.mxu0 %v345
    %364 = vmatprep.subr.bf16.mxu0 0
    %365 = vmatpush1.bf16.msra.mxu0 %v346
    %366 = vmatprep.subr.bf16.mxu0 0
    %367 = vmatpush1.bf16.msra.mxu0 %v347
    %368 = vmatprep.subr.bf16.mxu0 0
    %369 = vmatpush1.bf16.msra.mxu0 %v348
    %370 = vmatprep.subr.bf16.mxu0 0
    %371 = vmatpush1.bf16.msra.mxu0 %v349
    %372 = vmatprep.subr.bf16.mxu0 0
    %373 = vmatpush1.bf16.msra.mxu0 %v350
    %374 = vmatprep.subr.bf16.mxu0 0
    %375 = vmatpush1.bf16.msra.mxu0 %v351
    %376 = vmatprep.subr.bf16.mxu0 0
    %377 = vmatpush1.bf16.msra.mxu0 0
    %378 = vmatprep.subr.bf16.mxu0 0
    %379 = vmatpush1.bf16.msra.mxu0 0
    %380 = vmatprep.subr.bf16.mxu0 0
    %381 = vmatpush1.bf16.msra.mxu0 0
    %382 = vmatprep.subr.bf16.mxu0 0
    %383 = vmatpush1.bf16.msra.mxu0 0
    %384 = vmatprep.subr.bf16.mxu0 0
    %385 = vmatpush1.bf16.msra.mxu0 0
    %386 = vmatprep.subr.bf16.mxu0 0
    %387 = vmatpush1.bf16.msra.mxu0 0
    %388 = vmatprep.subr.bf16.mxu0 0
    %389 = vmatpush1.bf16.msra.mxu0 0
    %390 = vmatprep.subr.bf16.mxu0 0
    %391 = vmatpush1.bf16.msra.mxu0 0
    %392 = vmatprep.mubr.bf16.mxu0 0
    %393 = vmatmul.mubr.bf16.gmra.mrb[0].mxu0 %v288
    %v394 = vpop.f32.mrb[0].mxu0
    %v395 = vadd.f32 %v310, %v394
    %v396 = vpop.f32.mrb[0].mxu0
    %v397 = vpop.f32.mrb[0].mxu0
    %v398 = vadd.f32 %v310, %v397
    %v399 = vpop.f32.mrb[0].mxu0
    %400 = vdwg.mxu0
    %401 = vadd.xlane.f32.xlu0 %v395
    %v402 = vpop.xlane.xlu0 %401
    %403 = vadd.xlane.f32.xlu0 %v398
    %v404 = vpop.xlane.xlu0 %403
    %v405 = vmul.f32 %v402, 0.03125
    %v406 = vmul.f32 %v404, 0.03125
    %v407 = vmul.f32 %v395, %v395
    %v408 = vmul.f32 %v398, %v398
    %409 = vadd.xlane.f32.xlu0 %v407
    %v410 = vpop.xlane.xlu0 %409
    %411 = vadd.xlane.f32.xlu0 %v408
    %v412 = vpop.xlane.xlu0 %411
    %v413 = vmul.f32 %v410, 0.03125
    %v414 = vmul.f32 %v412, 0.03125
    %v415 = vmul.f32 %v405, %v405
    %v416 = vmul.f32 %v406, %v406
    %v417 = vsub.f32 %v413, %v415
    %v418 = vsub.f32 %v414, %v416
    %v419 = vsub.f32 %v395, %v405
    %v420 = vsub.f32 %v398, %v406
    %v421 = vadd.f32 %v417, 1e-05
    %v422 = vadd.f32 %v418, 1e-05
    %v423 = vrsqrt.pop %v421
    %v424 = vrsqrt.pop %v422
    %v425 = vmul.f32 %v419, %v423
    %v426 = vmul.f32 %v420, %v424
    %v427 = vld [vmem:[%s7] sm:$0x1]
    %v429 = vlaneseq
    %v430 = vshrl.u32 %v429, 7
    %v431 = vsub.s32 0, %v430
    %v432 = vrot.slane %v427, %v431
    %v434 = vmul.f32 %v425, %v432
    %v435 = vmul.f32 %v426, %v432
    %v436 = vld [vmem:[%s8] sm:$0x1]
    %v438 = vlaneseq
    %v439 = vshrl.u32 %v438, 7
    %v440 = vsub.s32 0, %v439
    %v441 = vrot.slane %v436, %v440
    %v443 = vadd.f32 %v434, %v441
    %v444 = vadd.f32 %v435, %v441
    %v445 = vmul.f32 %v443, 0.5
    %v446 = vmul.f32 %v444, 0.5
    %v447 = vmul.f32 %v443, 0.70710677
    %v448 = vmul.f32 %v444, 0.70710677
    %v449 = verf.f32.pop %v447
    %v450 = verf.f32.pop %v448
    %v451 = vadd.f32 %v449, 1.0
    %v452 = vadd.f32 %v450, 1.0
    %v453 = vmul.f32 %v445, %v451
    %v454 = vmul.f32 %v446, %v452
    %v455 = vpack.c.bf16 %v454, %v453
    %v456 = vld [vmem:[#allocation8] sm:$0xf]
    %v457 = vld [vmem:[#allocation8 + $0x4] sm:$0xf]
    %v458 = vld [vmem:[#allocation8 + $0x8] sm:$0xf]
    %v459 = vld [vmem:[#allocation8 + $0xc] sm:$0xf]
    %v460 = vld [vmem:[#allocation8 + $0x10] sm:$0xf]
    %v461 = vld [vmem:[#allocation8 + $0x14] sm:$0xf]
    %v462 = vld [vmem:[#allocation8 + $0x18] sm:$0xf]
    %v463 = vld [vmem:[#allocation8 + $0x1c] sm:$0xf]
    %v464 = vld [vmem:[#allocation8 + $0x20] sm:$0xf]
    %v465 = vld [vmem:[#allocation8 + $0x24] sm:$0xf]
    %v466 = vld [vmem:[#allocation8 + $0x28] sm:$0xf]
    %v467 = vld [vmem:[#allocation8 + $0x2c] sm:$0xf]
    %v468 = vld [vmem:[#allocation8 + $0x30] sm:$0xf]
    %v469 = vld [vmem:[#allocation8 + $0x34] sm:$0xf]
    %v470 = vld [vmem:[#allocation8 + $0x38] sm:$0xf]
    %v471 = vld [vmem:[#allocation8 + $0x3c] sm:$0xf]
    %v472 = vld [vmem:[%s10] sm:$0x1]
    %v474 = vlaneseq
    %v475 = vshrl.u32 %v474, 7
    %v476 = vsub.s32 0, %v475
    %v477 = vrot.slane %v472, %v476
    %v495 = vunpack.c.l.b16 %v456
    %v496 = vunpack.c.l.b16 %v457
    %v497 = vunpack.c.l.b16 %v458
    %v498 = vunpack.c.l.b16 %v459
    %v499 = vunpack.c.l.b16 %v460
    %v500 = vunpack.c.l.b16 %v461
    %v501 = vunpack.c.l.b16 %v462
    %v502 = vunpack.c.l.b16 %v463
    %v503 = vunpack.c.l.b16 %v464
    %v504 = vunpack.c.l.b16 %v465
    %v505 = vunpack.c.l.b16 %v466
    %v506 = vunpack.c.l.b16 %v467
    %v507 = vunpack.c.l.b16 %v468
    %v508 = vunpack.c.l.b16 %v469
    %v509 = vunpack.c.l.b16 %v470
    %v510 = vunpack.c.l.b16 %v471
    %v511 = vpack.c.b16 %v496, %v495
    %v512 = vpack.c.b16 %v498, %v497
    %v513 = vpack.c.b16 %v500, %v499
    %v514 = vpack.c.b16 %v502, %v501
    %v515 = vpack.c.b16 %v504, %v503
    %v516 = vpack.c.b16 %v506, %v505
    %v517 = vpack.c.b16 %v508, %v507
    %v518 = vpack.c.b16 %v510, %v509
    %527 = vmatprep.subr.bf16.mxu0 0
    %528 = vmatpush1.bf16.msra.mxu0 %v511
    %529 = vmatprep.subr.bf16.mxu0 0
    %530 = vmatpush1.bf16.msra.mxu0 %v512
    %531 = vmatprep.subr.bf16.mxu0 0
    %532 = vmatpush1.bf16.msra.mxu0 %v513
    %533 = vmatprep.subr.bf16.mxu0 0
    %534 = vmatpush1.bf16.msra.mxu0 %v514
    %535 = vmatprep.subr.bf16.mxu0 0
    %536 = vmatpush1.bf16.msra.mxu0 %v515
    %537 = vmatprep.subr.bf16.mxu0 0
    %538 = vmatpush1.bf16.msra.mxu0 %v516
    %539 = vmatprep.subr.bf16.mxu0 0
    %540 = vmatpush1.bf16.msra.mxu0 %v517
    %541 = vmatprep.subr.bf16.mxu0 0
    %542 = vmatpush1.bf16.msra.mxu0 %v518
    %543 = vmatprep.subr.bf16.mxu0 0
    %544 = vmatpush1.bf16.msra.mxu0 0
    %545 = vmatprep.subr.bf16.mxu0 0
    %546 = vmatpush1.bf16.msra.mxu0 0
    %547 = vmatprep.subr.bf16.mxu0 0
    %548 = vmatpush1.bf16.msra.mxu0 0
    %549 = vmatprep.subr.bf16.mxu0 0
    %550 = vmatpush1.bf16.msra.mxu0 0
    %551 = vmatprep.subr.bf16.mxu0 0
    %552 = vmatpush1.bf16.msra.mxu0 0
    %553 = vmatprep.subr.bf16.mxu0 0
    %554 = vmatpush1.bf16.msra.mxu0 0
    %555 = vmatprep.subr.bf16.mxu0 0
    %556 = vmatpush1.bf16.msra.mxu0 0
    %557 = vmatprep.subr.bf16.mxu0 0
    %558 = vmatpush1.bf16.msra.mxu0 0
    %559 = vmatprep.mubr.bf16.mxu0 0
    %560 = vmatmul.mubr.bf16.gmra.mrb[0].mxu0 %v455
    %v561 = vpop.f32.mrb[0].mxu0
    %v562 = vadd.f32 %v477, %v561
    %v563 = vpop.f32.mrb[0].mxu0
    %v564 = vpop.f32.mrb[0].mxu0
    %v565 = vadd.f32 %v477, %v564
    %v566 = vpop.f32.mrb[0].mxu0
    %567 = vdwg.mxu0
    %v568 = vpack.c.bf16 %v565, %v562
    %v569 = vld [vmem:[#allocation10] sm:$0xf]
    %v570 = vld [vmem:[#allocation10 + $0x4] sm:$0xf]
    %v571 = vld [vmem:[#allocation10 + $0x8] sm:$0xf]
    %v572 = vld [vmem:[#allocation10 + $0xc] sm:$0xf]
    %v573 = vld [vmem:[#allocation10 + $0x10] sm:$0xf]
    %v574 = vld [vmem:[#allocation10 + $0x14] sm:$0xf]
    %v575 = vld [vmem:[#allocation10 + $0x18] sm:$0xf]
    %v576 = vld [vmem:[#allocation10 + $0x1c] sm:$0xf]
    %v577 = vld [vmem:[#allocation10 + $0x20] sm:$0xf]
    %v578 = vld [vmem:[#allocation10 + $0x24] sm:$0xf]
    %v579 = vld [vmem:[#allocation10 + $0x28] sm:$0xf]
    %v580 = vld [vmem:[#allocation10 + $0x2c] sm:$0xf]
    %v581 = vld [vmem:[#allocation10 + $0x30] sm:$0xf]
    %v582 = vld [vmem:[#allocation10 + $0x34] sm:$0xf]
    %v583 = vld [vmem:[#allocation10 + $0x38] sm:$0xf]
    %v584 = vld [vmem:[#allocation10 + $0x3c] sm:$0xf]
    %v585 = vld [vmem:[%s12] sm:$0x1]
    %v587 = vlaneseq
    %v588 = vshrl.u32 %v587, 7
    %v589 = vsub.s32 0, %v588
    %v590 = vrot.slane %v585, %v589
    %v608 = vunpack.c.l.b16 %v569
    %v609 = vunpack.c.l.b16 %v570
    %v610 = vunpack.c.l.b16 %v571
    %v611 = vunpack.c.l.b16 %v572
    %v612 = vunpack.c.l.b16 %v573
    %v613 = vunpack.c.l.b16 %v574
    %v614 = vunpack.c.l.b16 %v575
    %v615 = vunpack.c.l.b16 %v576
    %v616 = vunpack.c.l.b16 %v577
    %v617 = vunpack.c.l.b16 %v578
    %v618 = vunpack.c.l.b16 %v579
    %v619 = vunpack.c.l.b16 %v580
    %v620 = vunpack.c.l.b16 %v581
    %v621 = vunpack.c.l.b16 %v582
    %v622 = vunpack.c.l.b16 %v583
    %v623 = vunpack.c.l.b16 %v584
    %v624 = vpack.c.b16 %v609, %v608
    %v625 = vpack.c.b16 %v611, %v610
    %v626 = vpack.c.b16 %v613, %v612
    %v627 = vpack.c.b16 %v615, %v614
    %v628 = vpack.c.b16 %v617, %v616
    %v629 = vpack.c.b16 %v619, %v618
    %v630 = vpack.c.b16 %v621, %v620
    %v631 = vpack.c.b16 %v623, %v622
    %640 = vmatprep.subr.bf16.mxu0 0
    %641 = vmatpush1.bf16.msra.mxu0 %v624
    %642 = vmatprep.subr.bf16.mxu0 0
    %643 = vmatpush1.bf16.msra.mxu0 %v625
    %644 = vmatprep.subr.bf16.mxu0 0
    %645 = vmatpush1.bf16.msra.mxu0 %v626
    %646 = vmatprep.subr.bf16.mxu0 0
    %647 = vmatpush1.bf16.msra.mxu0 %v627
    %648 = vmatprep.subr.bf16.mxu0 0
    %649 = vmatpush1.bf16.msra.mxu0 %v628
    %650 = vmatprep.subr.bf16.mxu0 0
    %651 = vmatpush1.bf16.msra.mxu0 %v629
    %652 = vmatprep.subr.bf16.mxu0 0
    %653 = vmatpush1.bf16.msra.mxu0 %v630
    %654 = vmatprep.subr.bf16.mxu0 0
    %655 = vmatpush1.bf16.msra.mxu0 %v631
    %656 = vmatprep.subr.bf16.mxu0 0
    %657 = vmatpush1.bf16.msra.mxu0 0
    %658 = vmatprep.subr.bf16.mxu0 0
    %659 = vmatpush1.bf16.msra.mxu0 0
    %660 = vmatprep.subr.bf16.mxu0 0
    %661 = vmatpush1.bf16.msra.mxu0 0
    %662 = vmatprep.subr.bf16.mxu0 0
    %663 = vmatpush1.bf16.msra.mxu0 0
    %664 = vmatprep.subr.bf16.mxu0 0
    %665 = vmatpush1.bf16.msra.mxu0 0
    %666 = vmatprep.subr.bf16.mxu0 0
    %667 = vmatpush1.bf16.msra.mxu0 0
    %668 = vmatprep.subr.bf16.mxu0 0
    %669 = vmatpush1.bf16.msra.mxu0 0
    %670 = vmatprep.subr.bf16.mxu0 0
    %671 = vmatpush1.bf16.msra.mxu0 0
    %672 = vmatprep.mubr.bf16.mxu0 0
    %673 = vmatmul.mubr.bf16.gmra.mrb[0].mxu0 %v568
    %v674 = vpop.f32.mrb[0].mxu0
    %v675 = vadd.f32 %v590, %v674
    %v676 = vpop.f32.mrb[0].mxu0
    %v677 = vpop.f32.mrb[0].mxu0
    %v678 = vadd.f32 %v590, %v677
    %v679 = vpop.f32.mrb[0].mxu0
    %680 = vdwg.mxu0
    %681 = vst [vmem:[#allocation11] sm:$0xff] %v675
    %682 = vst [vmem:[#allocation11 + $0x8] sm:$0xff] %v678
    // Predicated region
    $region74: #{tpu_custom_call.1} parent=1 // pred_check
      _
    $region75: #{tpu_custom_call.1} parent=1 // pred_check_branch
      %684 = sbr.rel (0) target = $region77
    $region76: #{tpu_custom_call.1} parent=1 // pred_region
      %s686 = ssub.s32 256, 256
      %687 = vsyncadd [#allocation4], %s686
      %s688 = sshll.u32 [#allocation11], 4
      %s689 = int_to_ptr.vmem [resolvable:$true] %s688
      %694 = dma.vmem_to_hbm [thread:$0]  %s689, 256, %s13, [#allocation4], 128, 128, 8
    $region77: #{tpu_custom_call.1} parent=1 // pred_fallthru
      _
    // Predicated region
    $region78: #{tpu_custom_call.1} parent=1 // pred_check
      _
    $region79: #{tpu_custom_call.1} parent=1 // pred_check_branch
      %696 = sbr.rel (0) target = $region81
    $region80: #{tpu_custom_call.1} parent=1 // pred_region
      %697 = dma.done [#allocation4], 256
    $region81: #{tpu_custom_call.1} parent=1 // pred_fallthru
      _
    %698 = vsyncpa [#allocation3], 1
    %699 = vsyncpa [#allocation6], 1
    %700 = vsyncpa [#allocation9], 1
    %701 = vsyncpa [#allocation4], 1

// kernel: tpu_custom_call.1
$region0: #{tpu_custom_call.1}
  #allocation0 [shape = 'u32[]', space=smem, size = 0x4, offset = 0x4, fixed_abs, tag = 'smem constant byte address 0x4 - core index']
  #allocation1 [shape = 'u32[144,128]{1,0:T(1,128)}', space=vmem, size = 0x12000, scoped, tag = 'internal scratch']
  %s0 = inlined_call_operand.hbm [shape: bf16[16,128], index: 0, kind: input, shape index: {}]
  %s1 = inlined_call_operand.hbm [shape: bf16[128,128], index: 1, kind: input, shape index: {}]
  %s2 = inlined_call_operand.vmem [shape: f32[1,128], index: 2, kind: input, shape index: {}]
  %s3 = inlined_call_operand.vmem [shape: f32[1,128], index: 3, kind: input, shape index: {}]
  %s4 = inlined_call_operand.vmem [shape: f32[1,128], index: 4, kind: input, shape index: {}]
  %s5 = inlined_call_operand.hbm [shape: bf16[128,128], index: 5, kind: input, shape index: {}]
  %s6 = inlined_call_operand.vmem [shape: f32[1,128], index: 6, kind: input, shape index: {}]
  %s7 = inlined_call_operand.vmem [shape: f32[1,128], index: 7, kind: input, shape index: {}]
  %s8 = inlined_call_operand.vmem [shape: f32[1,128], index: 8, kind: input, shape index: {}]
  %s9 = inlined_call_operand.hbm [shape: bf16[128,128], index: 9, kind: input, shape index: {}]
  %s10 = inlined_call_operand.vmem [shape: f32[1,128], index: 10, kind: input, shape index: {}]
  %s11 = inlined_call_operand.hbm [shape: bf16[128,128], index: 11, kind: input, shape index: {}]
  %s12 = inlined_call_operand.vmem [shape: f32[1,128], index: 12, kind: input, shape index: {}]
  %s13 = inlined_call_operand.hbm [shape: f32[16,128], index: 13, kind: output, shape index: {}]
  %s14 = sld [smem:[#allocation0]]
  $region82: #{tpu_custom_call.1} parent=0
    _
  %s16 = ssub.s32 1, %s14
  %s17 = scalar_select 0, %s16, %s14
  $region1: #{tpu_custom_call.1} parent=0
    #allocation2 [shape = 'u8[4096]{0}', space=vmem, size = 0x1000, scoped, tag = 'input window, operand 0, single buffered']
    #allocation3 [shape = 's32[1]{0}', space=sflag, size = 0x4, scoped, tag = 'scoped memory for tpu_custom_call.1']
    #allocation4 [shape = 's32[1]{0}', space=sflag, size = 0x4, scoped, tag = 'scoped memory for tpu_custom_call.1']
    #allocation5 [shape = 'u8[32768]{0}', space=vmem, size = 0x8000, scoped, tag = 'input window, operand 1, single buffered']
    #allocation6 [shape = 's32[1]{0}', space=sflag, size = 0x4, scoped, tag = 'scoped memory for tpu_custom_call.1']
    #allocation7 [shape = 'u8[32768]{0}', space=vmem, size = 0x8000, scoped, tag = 'input window, operand 5, single buffered']
    #allocation8 [shape = 'u8[32768]{0}', space=vmem, size = 0x8000, scoped, tag = 'input window, operand 9, single buffered']
    #allocation9 [shape = 's32[1]{0}', space=sflag, size = 0x4, scoped, tag = 'scoped memory for tpu_custom_call.1']
    #allocation10 [shape = 'u8[32768]{0}', space=vmem, size = 0x8000, scoped, tag = 'input window, operand 11, single buffered']
    #allocation11 [shape = 'u8[8192]{0}', space=vmem, size = 0x2000, scoped, tag = 'output window, operand 0, single buffered']
    %18 = vsyncpa [#allocation3], 0
    %19 = vsyncpa [#allocation6], 0
    %20 = vsyncpa [#allocation9], 0
    %21 = vsyncpa [#allocation4], 0
    // Predicated region
    $region2: #{tpu_custom_call.1} parent=1 // pred_check
      _
    $region3: #{tpu_custom_call.1} parent=1 // pred_check_branch
      %23 = sbr.rel (0) target = $region5
    $region4: #{tpu_custom_call.1} parent=1 // pred_region
      %s25 = ssub.s32 128, 128
      %26 = vsyncadd [#allocation3], %s25
      %s27 = sshll.u32 [#allocation2], 4
      %s28 = int_to_ptr.vmem [resolvable:$true] %s27
      %33 = dma.hbm_to_vmem [thread:$0]  %s0, 128, %s28, [#allocation3], 64, 64, 4
    $region5: #{tpu_custom_call.1} parent=1 // pred_fallthru
      _
    // Predicated region
    $region6: #{tpu_custom_call.1} parent=1 // pred_check
      _
    $region7: #{tpu_custom_call.1} parent=1 // pred_check_branch
      %35 = sbr.rel (0) target = $region9
    $region8: #{tpu_custom_call.1} parent=1 // pred_region
      %s37 = ssub.s32 1024, 1024
      %38 = vsyncadd [#allocation6], %s37
      %s39 = sshll.u32 [#allocation5], 4
      %s40 = int_to_ptr.vmem [resolvable:$true] %s39
      %45 = dma.hbm_to_vmem [thread:$0]  %s1, 1024, %s40, [#allocation6], 64, 64, 4
    $region9: #{tpu_custom_call.1} parent=1 // pred_fallthru
      _
    // Predicated region
    $region10: #{tpu_custom_call.1} parent=1 // pred_check
      _
    $region11: #{tpu_custom_call.1} parent=1 // pred_check_branch
      %47 = sbr.rel (0) target = $region13
    $region12: #{tpu_custom_call.1} parent=1 // pred_region
      _
    $region13: #{tpu_custom_call.1} parent=1 // pred_fallthru
      _
    // Predicated region
    $region14: #{tpu_custom_call.1} parent=1 // pred_check
      _
    $region15: #{tpu_custom_call.1} parent=1 // pred_check_branch
      %49 = sbr.rel (0) target = $region17
    $region16: #{tpu_custom_call.1} parent=1 // pred_region
      _
    $region17: #{tpu_custom_call.1} parent=1 // pred_fallthru
      _
    // Predicated region
    $region18: #{tpu_custom_call.1} parent=1 // pred_check
      _
    $region19: #{tpu_custom_call.1} parent=1 // pred_check_branch
      %51 = sbr.rel (0) target = $region21
    $region20: #{tpu_custom_call.1} parent=1 // pred_region
      _
    $region21: #{tpu_custom_call.1} parent=1 // pred_fallthru
      _
    // Predicated region
    $region22: #{tpu_custom_call.1} parent=1 // pred_check
      _
    $region23: #{tpu_custom_call.1} parent=1 // pred_check_branch
      %53 = sbr.rel (0) target = $region25
    $region24: #{tpu_custom_call.1} parent=1 // pred_region
      %s55 = ssub.s32 1024, 1024
      %56 = vsyncadd [#allocation6], %s55
      %s57 = sshll.u32 [#allocation7], 4
      %s58 = int_to_ptr.vmem [resolvable:$true] %s57
      %63 = dma.hbm_to_vmem [thread:$0]  %s5, 1024, %s58, [#allocation6], 64, 64, 4
    $region25: #{tpu_custom_call.1} parent=1 // pred_fallthru
      _
    // Predicated region
    $region26: #{tpu_custom_call.1} parent=1 // pred_check
      _
    $region27: #{tpu_custom_call.1} parent=1 // pred_check_branch
      %65 = sbr.rel (0) target = $region29
    $region28: #{tpu_custom_call.1} parent=1 // pred_region
      _
    $region29: #{tpu_custom_call.1} parent=1 // pred_fallthru
      _
    // Predicated region
    $region30: #{tpu_custom_call.1} parent=1 // pred_check
      _
    $region31: #{tpu_custom_call.1} parent=1 // pred_check_branch
      %67 = sbr.rel (0) target = $region33
    $region32: #{tpu_custom_call.1} parent=1 // pred_region
      _
    $region33: #{tpu_custom_call.1} parent=1 // pred_fallthru
      _
    // Predicated region
    $region34: #{tpu_custom_call.1} parent=1 // pred_check
      _
    $region35: #{tpu_custom_call.1} parent=1 // pred_check_branch
      %69 = sbr.rel (0) target = $region37
    $region36: #{tpu_custom_call.1} parent=1 // pred_region
      _
    $region37: #{tpu_custom_call.1} parent=1 // pred_fallthru
      _
    // Predicated region
    $region38: #{tpu_custom_call.1} parent=1 // pred_check
      _
    $region39: #{tpu_custom_call.1} parent=1 // pred_check_branch
      %71 = sbr.rel (0) target = $region41
    $region40: #{tpu_custom_call.1} parent=1 // pred_region
      %s73 = ssub.s32 1024, 1024
      %74 = vsyncadd [#allocation9], %s73
      %s75 = sshll.u32 [#allocation8], 4
      %s76 = int_to_ptr.vmem [resolvable:$true] %s75
      %81 = dma.hbm_to_vmem [thread:$0]  %s9, 1024, %s76, [#allocation9], 64, 64, 4
    $region41: #{tpu_custom_call.1} parent=1 // pred_fallthru
      _
    // Predicated region
    $region42: #{tpu_custom_call.1} parent=1 // pred_check
      _
    $region43: #{tpu_custom_call.1} parent=1 // pred_check_branch
      %83 = sbr.rel (0) target = $region45
    $region44: #{tpu_custom_call.1} parent=1 // pred_region
      _
    $region45: #{tpu_custom_call.1} parent=1 // pred_fallthru
      _
    // Predicated region
    $region46: #{tpu_custom_call.1} parent=1 // pred_check
      _
    $region47: #{tpu_custom_call.1} parent=1 // pred_check_branch
      %85 = sbr.rel (0) target = $region49
    $region48: #{tpu_custom_call.1} parent=1 // pred_region
      %s87 = ssub.s32 1024, 1024
      %88 = vsyncadd [#allocation9], %s87
      %s89 = sshll.u32 [#allocation10], 4
      %s90 = int_to_ptr.vmem [resolvable:$true] %s89
      %95 = dma.hbm_to_vmem [thread:$0]  %s11, 1024, %s90, [#allocation9], 64, 64, 4
    $region49: #{tpu_custom_call.1} parent=1 // pred_fallthru
      _
    // Predicated region
    $region50: #{tpu_custom_call.1} parent=1 // pred_check
      _
    $region51: #{tpu_custom_call.1} parent=1 // pred_check_branch
      %97 = sbr.rel (0) target = $region53
    $region52: #{tpu_custom_call.1} parent=1 // pred_region
      _
    $region53: #{tpu_custom_call.1} parent=1 // pred_fallthru
      _
    // Predicated region
    $region54: #{tpu_custom_call.1} parent=1 // pred_check
      _
    $region55: #{tpu_custom_call.1} parent=1 // pred_check_branch
      %99 = sbr.rel (0) target = $region57
    $region56: #{tpu_custom_call.1} parent=1 // pred_region
      %100 = dma.done [#allocation3], 128
    $region57: #{tpu_custom_call.1} parent=1 // pred_fallthru
      _
    // Predicated region
    $region58: #{tpu_custom_call.1} parent=1 // pred_check
      _
    $region59: #{tpu_custom_call.1} parent=1 // pred_check_branch
      %102 = sbr.rel (0) target = $region61
    $region60: #{tpu_custom_call.1} parent=1 // pred_region
      %103 = dma.done [#allocation6], 1024
    $region61: #{tpu_custom_call.1} parent=1 // pred_fallthru
      _
    // Predicated region
    $region62: #{tpu_custom_call.1} parent=1 // pred_check
      _
    $region63: #{tpu_custom_call.1} parent=1 // pred_check_branch
      %105 = sbr.rel (0) target = $region65
    $region64: #{tpu_custom_call.1} parent=1 // pred_region
      %106 = dma.done [#allocation6], 1024
    $region65: #{tpu_custom_call.1} parent=1 // pred_fallthru
      _
    // Predicated region
    $region66: #{tpu_custom_call.1} parent=1 // pred_check
      _
    $region67: #{tpu_custom_call.1} parent=1 // pred_check_branch
      %108 = sbr.rel (0) target = $region69
    $region68: #{tpu_custom_call.1} parent=1 // pred_region
      %109 = dma.done [#allocation9], 1024
    $region69: #{tpu_custom_call.1} parent=1 // pred_fallthru
      _
    // Predicated region
    $region70: #{tpu_custom_call.1} parent=1 // pred_check
      _
    $region71: #{tpu_custom_call.1} parent=1 // pred_check_branch
      %111 = sbr.rel (0) target = $region73
    $region72: #{tpu_custom_call.1} parent=1 // pred_region
      %112 = dma.done [#allocation9], 1024
    $region73: #{tpu_custom_call.1} parent=1 // pred_fallthru
      _
    %v114 = vld [vmem:[#allocation2] sm:$0xf]
    %v115 = vld [vmem:[#allocation2 + $0x4] sm:$0xf]
    %v116 = vld [vmem:[#allocation5] sm:$0xf]
    %v117 = vld [vmem:[#allocation5 + $0x4] sm:$0xf]
    %v118 = vld [vmem:[#allocation5 + $0x8] sm:$0xf]
    %v119 = vld [vmem:[#allocation5 + $0xc] sm:$0xf]
    %v120 = vld [vmem:[#allocation5 + $0x10] sm:$0xf]
    %v121 = vld [vmem:[#allocation5 + $0x14] sm:$0xf]
    %v122 = vld [vmem:[#allocation5 + $0x18] sm:$0xf]
    %v123 = vld [vmem:[#allocation5 + $0x1c] sm:$0xf]
    %v124 = vld [vmem:[#allocation5 + $0x20] sm:$0xf]
    %v125 = vld [vmem:[#allocation5 + $0x24] sm:$0xf]
    %v126 = vld [vmem:[#allocation5 + $0x28] sm:$0xf]
    %v127 = vld [vmem:[#allocation5 + $0x2c] sm:$0xf]
    %v128 = vld [vmem:[#allocation5 + $0x30] sm:$0xf]
    %v129 = vld [vmem:[#allocation5 + $0x34] sm:$0xf]
    %v130 = vld [vmem:[#allocation5 + $0x38] sm:$0xf]
    %v131 = vld [vmem:[#allocation5 + $0x3c] sm:$0xf]
    %v132 = vld [vmem:[%s2] sm:$0x1]
    %v134 = vlaneseq
    %v135 = vshrl.u32 %v134, 7
    %v136 = vsub.s32 0, %v135
    %v137 = vrot.slane %v132, %v136
    %v141 = vunpack.c.l.b16 %v114
    %v142 = vunpack.c.l.b16 %v115
    %v143 = vpack.c.b16 %v142, %v141
    %v161 = vunpack.c.l.b16 %v116
    %v162 = vunpack.c.l.b16 %v117
    %v163 = vunpack.c.l.b16 %v118
    %v164 = vunpack.c.l.b16 %v119
    %v165 = vunpack.c.l.b16 %v120
    %v166 = vunpack.c.l.b16 %v121
    %v167 = vunpack.c.l.b16 %v122
    %v168 = vunpack.c.l.b16 %v123
    %v169 = vunpack.c.l.b16 %v124
    %v170 = vunpack.c.l.b16 %v125
    %v171 = vunpack.c.l.b16 %v126
    %v172 = vunpack.c.l.b16 %v127
    %v173 = vunpack.c.l.b16 %v128
    %v174 = vunpack.c.l.b16 %v129
    %v175 = vunpack.c.l.b16 %v130
    %v176 = vunpack.c.l.b16 %v131
    %v177 = vpack.c.b16 %v162, %v161
    %v178 = vpack.c.b16 %v164, %v163
    %v179 = vpack.c.b16 %v166, %v165
    %v180 = vpack.c.b16 %v168, %v167
    %v181 = vpack.c.b16 %v170, %v169
    %v182 = vpack.c.b16 %v172, %v171
    %v183 = vpack.c.b16 %v174, %v173
    %v184 = vpack.c.b16 %v176, %v175
    %193 = vmatprep.subr.bf16.mxu0 0
    %194 = vmatpush1.bf16.msra.mxu0 %v177
    %195 = vmatprep.subr.bf16.mxu0 0
    %196 = vmatpush1.bf16.msra.mxu0 %v178
    %197 = vmatprep.subr.bf16.mxu0 0
    %198 = vmatpush1.bf16.msra.mxu0 %v179
    %199 = vmatprep.subr.bf16.mxu0 0
    %200 = vmatpush1.bf16.msra.mxu0 %v180
    %201 = vmatprep.subr.bf16.mxu0 0
    %202 = vmatpush1.bf16.msra.mxu0 %v181
    %203 = vmatprep.subr.bf16.mxu0 0
    %204 = vmatpush1.bf16.msra.mxu0 %v182
    %205 = vmatprep.subr.bf16.mxu0 0
    %206 = vmatpush1.bf16.msra.mxu0 %v183
    %207 = vmatprep.subr.bf16.mxu0 0
    %208 = vmatpush1.bf16.msra.mxu0 %v184
    %209 = vmatprep.subr.bf16.mxu0 0
    %210 = vmatpush1.bf16.msra.mxu0 0
    %211 = vmatprep.subr.bf16.mxu0 0
    %212 = vmatpush1.bf16.msra.mxu0 0
    %213 = vmatprep.subr.bf16.mxu0 0
    %214 = vmatpush1.bf16.msra.mxu0 0
    %215 = vmatprep.subr.bf16.mxu0 0
    %216 = vmatpush1.bf16.msra.mxu0 0
    %217 = vmatprep.subr.bf16.mxu0 0
    %218 = vmatpush1.bf16.msra.mxu0 0
    %219 = vmatprep.subr.bf16.mxu0 0
    %220 = vmatpush1.bf16.msra.mxu0 0
    %221 = vmatprep.subr.bf16.mxu0 0
    %222 = vmatpush1.bf16.msra.mxu0 0
    %223 = vmatprep.subr.bf16.mxu0 0
    %224 = vmatpush1.bf16.msra.mxu0 0
    %225 = vmatprep.mubr.bf16.mxu0 0
    %226 = vmatmul.mubr.bf16.gmra.mrb[0].mxu0 %v143
    %v227 = vpop.f32.mrb[0].mxu0
    %v228 = vadd.f32 %v137, %v227
    %v229 = vpop.f32.mrb[0].mxu0
    %v230 = vpop.f32.mrb[0].mxu0
    %v231 = vadd.f32 %v137, %v230
    %v232 = vpop.f32.mrb[0].mxu0
    %233 = vdwg.mxu0
    %234 = vadd.xlane.f32.xlu0 %v228
    %v235 = vpop.xlane.xlu0 %234
    %236 = vadd.xlane.f32.xlu0 %v231
    %v237 = vpop.xlane.xlu0 %236
    %v238 = vmul.f32 %v235, 0.03125
    %v239 = vmul.f32 %v237, 0.03125
    %v240 = vmul.f32 %v228, %v228
    %v241 = vmul.f32 %v231, %v231
    %242 = vadd.xlane.f32.xlu0 %v240
    %v243 = vpop.xlane.xlu0 %242
    %244 = vadd.xlane.f32.xlu0 %v241
    %v245 = vpop.xlane.xlu0 %244
    %v246 = vmul.f32 %v243, 0.03125
    %v247 = vmul.f32 %v245, 0.03125
    %v248 = vmul.f32 %v238, %v238
    %v249 = vmul.f32 %v239, %v239
    %v250 = vsub.f32 %v246, %v248
    %v251 = vsub.f32 %v247, %v249
    %v252 = vsub.f32 %v228, %v238
    %v253 = vsub.f32 %v231, %v239
    %v254 = vadd.f32 %v250, 1e-05
    %v255 = vadd.f32 %v251, 1e-05
    %v256 = vrsqrt.pop %v254
    %v257 = vrsqrt.pop %v255
    %v258 = vmul.f32 %v252, %v256
    %v259 = vmul.f32 %v253, %v257
    %v260 = vld [vmem:[%s3] sm:$0x1]
    %v262 = vlaneseq
    %v263 = vshrl.u32 %v262, 7
    %v264 = vsub.s32 0, %v263
    %v265 = vrot.slane %v260, %v264
    %v267 = vmul.f32 %v258, %v265
    %v268 = vmul.f32 %v259, %v265
    %v269 = vld [vmem:[%s4] sm:$0x1]
    %v271 = vlaneseq
    %v272 = vshrl.u32 %v271, 7
    %v273 = vsub.s32 0, %v272
    %v274 = vrot.slane %v269, %v273
    %v276 = vadd.f32 %v267, %v274
    %v277 = vadd.f32 %v268, %v274
    %v278 = vmul.f32 %v276, 0.5
    %v279 = vmul.f32 %v277, 0.5
    %v280 = vmul.f32 %v276, 0.70710677
    %v281 = vmul.f32 %v277, 0.70710677
    %v282 = verf.f32.pop %v280
    %v283 = verf.f32.pop %v281
    %v284 = vadd.f32 %v282, 1.0
    %v285 = vadd.f32 %v283, 1.0
    %v286 = vmul.f32 %v278, %v284
    %v287 = vmul.f32 %v279, %v285
    %v288 = vpack.c.bf16 %v287, %v286
    %v289 = vld [vmem:[#allocation7] sm:$0xf]
    %v290 = vld [vmem:[#allocation7 + $0x4] sm:$0xf]
    %v291 = vld [vmem:[#allocation7 + $0x8] sm:$0xf]
    %v292 = vld [vmem:[#allocation7 + $0xc] sm:$0xf]
    %v293 = vld [vmem:[#allocation7 + $0x10] sm:$0xf]
    %v294 = vld [vmem:[#allocation7 + $0x14] sm:$0xf]
    %v295 = vld [vmem:[#allocation7 + $0x18] sm:$0xf]
    %v296 = vld [vmem:[#allocation7 + $0x1c] sm:$0xf]
    %v297 = vld [vmem:[#allocation7 + $0x20] sm:$0xf]
    %v298 = vld [vmem:[#allocation7 + $0x24] sm:$0xf]
    %v299 = vld [vmem:[#allocation7 + $0x28] sm:$0xf]
    %v300 = vld [vmem:[#allocation7 + $0x2c] sm:$0xf]
    %v301 = vld [vmem:[#allocation7 + $0x30] sm:$0xf]
    %v302 = vld [vmem:[#allocation7 + $0x34] sm:$0xf]
    %v303 = vld [vmem:[#allocation7 + $0x38] sm:$0xf]
    %v304 = vld [vmem:[#allocation7 + $0x3c] sm:$0xf]
    %v305 = vld [vmem:[%s6] sm:$0x1]
    %v307 = vlaneseq
    %v308 = vshrl.u32 %v307, 7
    %v309 = vsub.s32 0, %v308
    %v310 = vrot.slane %v305, %v309
    %v328 = vunpack.c.l.b16 %v289
    %v329 = vunpack.c.l.b16 %v290
    %v330 = vunpack.c.l.b16 %v291
    %v331 = vunpack.c.l.b16 %v292
    %v332 = vunpack.c.l.b16 %v293
    %v333 = vunpack.c.l.b16 %v294
    %v334 = vunpack.c.l.b16 %v295
    %v335 = vunpack.c.l.b16 %v296
    %v336 = vunpack.c.l.b16 %v297
    %v337 = vunpack.c.l.b16 %v298
    %v338 = vunpack.c.l.b16 %v299
    %v339 = vunpack.c.l.b16 %v300
    %v340 = vunpack.c.l.b16 %v301
    %v341 = vunpack.c.l.b16 %v302
    %v342 = vunpack.c.l.b16 %v303
    %v343 = vunpack.c.l.b16 %v304
    %v344 = vpack.c.b16 %v329, %v328
    %v345 = vpack.c.b16 %v331, %v330
    %v346 = vpack.c.b16 %v333, %v332
    %v347 = vpack.c.b16 %v335, %v334
    %v348 = vpack.c.b16 %v337, %v336
    %v349 = vpack.c.b16 %v339, %v338
    %v350 = vpack.c.b16 %v341, %v340
    %v351 = vpack.c.b16 %v343, %v342
    %360 = vmatprep.subr.bf16.mxu0 0
    %361 = vmatpush1.bf16.msra.mxu0 %v344
    %362 = vmatprep.subr.bf16.mxu0 0
    %363 = vmatpush1.bf16.msra.mxu0 %v345
    %364 = vmatprep.subr.bf16.mxu0 0
    %365 = vmatpush1.bf16.msra.mxu0 %v346
    %366 = vmatprep.subr.bf16.mxu0 0
    %367 = vmatpush1.bf16.msra.mxu0 %v347
    %368 = vmatprep.subr.bf16.mxu0 0
    %369 = vmatpush1.bf16.msra.mxu0 %v348
    %370 = vmatprep.subr.bf16.mxu0 0
    %371 = vmatpush1.bf16.msra.mxu0 %v349
    %372 = vmatprep.subr.bf16.mxu0 0
    %373 = vmatpush1.bf16.msra.mxu0 %v350
    %374 = vmatprep.subr.bf16.mxu0 0
    %375 = vmatpush1.bf16.msra.mxu0 %v351
    %376 = vmatprep.subr.bf16.mxu0 0
    %377 = vmatpush1.bf16.msra.mxu0 0
    %378 = vmatprep.subr.bf16.mxu0 0
    %379 = vmatpush1.bf16.msra.mxu0 0
    %380 = vmatprep.subr.bf16.mxu0 0
    %381 = vmatpush1.bf16.msra.mxu0 0
    %382 = vmatprep.subr.bf16.mxu0 0
    %383 = vmatpush1.bf16.msra.mxu0 0
    %384 = vmatprep.subr.bf16.mxu0 0
    %385 = vmatpush1.bf16.msra.mxu0 0
    %386 = vmatprep.subr.bf16.mxu0 0
    %387 = vmatpush1.bf16.msra.mxu0 0
    %388 = vmatprep.subr.bf16.mxu0 0
    %389 = vmatpush1.bf16.msra.mxu0 0
    %390 = vmatprep.subr.bf16.mxu0 0
    %391 = vmatpush1.bf16.msra.mxu0 0
    %392 = vmatprep.mubr.bf16.mxu0 0
    %393 = vmatmul.mubr.bf16.gmra.mrb[0].mxu0 %v288
    %v394 = vpop.f32.mrb[0].mxu0
    %v395 = vadd.f32 %v310, %v394
    %v396 = vpop.f32.mrb[0].mxu0
    %v397 = vpop.f32.mrb[0].mxu0
    %v398 = vadd.f32 %v310, %v397
    %v399 = vpop.f32.mrb[0].mxu0
    %400 = vdwg.mxu0
    %401 = vadd.xlane.f32.xlu0 %v395
    %v402 = vpop.xlane.xlu0 %401
    %403 = vadd.xlane.f32.xlu0 %v398
    %v404 = vpop.xlane.xlu0 %403
    %v405 = vmul.f32 %v402, 0.03125
    %v406 = vmul.f32 %v404, 0.03125
    %v407 = vmul.f32 %v395, %v395
    %v408 = vmul.f32 %v398, %v398
    %409 = vadd.xlane.f32.xlu0 %v407
    %v410 = vpop.xlane.xlu0 %409
    %411 = vadd.xlane.f32.xlu0 %v408
    %v412 = vpop.xlane.xlu0 %411
    %v413 = vmul.f32 %v410, 0.03125
    %v414 = vmul.f32 %v412, 0.03125
    %v415 = vmul.f32 %v405, %v405
    %v416 = vmul.f32 %v406, %v406
    %v417 = vsub.f32 %v413, %v415
    %v418 = vsub.f32 %v414, %v416
    %v419 = vsub.f32 %v395, %v405
    %v420 = vsub.f32 %v398, %v406
    %v421 = vadd.f32 %v417, 1e-05
    %v422 = vadd.f32 %v418, 1e-05
    %v423 = vrsqrt.pop %v421
    %v424 = vrsqrt.pop %v422
    %v425 = vmul.f32 %v419, %v423
    %v426 = vmul.f32 %v420, %v424
    %v427 = vld [vmem:[%s7] sm:$0x1]
    %v429 = vlaneseq
    %v430 = vshrl.u32 %v429, 7
    %v431 = vsub.s32 0, %v430
    %v432 = vrot.slane %v427, %v431
    %v434 = vmul.f32 %v425, %v432
    %v435 = vmul.f32 %v426, %v432
    %v436 = vld [vmem:[%s8] sm:$0x1]
    %v438 = vlaneseq
    %v439 = vshrl.u32 %v438, 7
    %v440 = vsub.s32 0, %v439
    %v441 = vrot.slane %v436, %v440
    %v443 = vadd.f32 %v434, %v441
    %v444 = vadd.f32 %v435, %v441
    %v445 = vmul.f32 %v443, 0.5
    %v446 = vmul.f32 %v444, 0.5
    %v447 = vmul.f32 %v443, 0.70710677
    %v448 = vmul.f32 %v444, 0.70710677
    %v449 = verf.f32.pop %v447
    %v450 = verf.f32.pop %v448
    %v451 = vadd.f32 %v449, 1.0
    %v452 = vadd.f32 %v450, 1.0
    %v453 = vmul.f32 %v445, %v451
    %v454 = vmul.f32 %v446, %v452
    %v455 = vpack.c.bf16 %v454, %v453
    %v456 = vld [vmem:[#allocation8] sm:$0xf]
    %v457 = vld [vmem:[#allocation8 + $0x4] sm:$0xf]
    %v458 = vld [vmem:[#allocation8 + $0x8] sm:$0xf]
    %v459 = vld [vmem:[#allocation8 + $0xc] sm:$0xf]
    %v460 = vld [vmem:[#allocation8 + $0x10] sm:$0xf]
    %v461 = vld [vmem:[#allocation8 + $0x14] sm:$0xf]
    %v462 = vld [vmem:[#allocation8 + $0x18] sm:$0xf]
    %v463 = vld [vmem:[#allocation8 + $0x1c] sm:$0xf]
    %v464 = vld [vmem:[#allocation8 + $0x20] sm:$0xf]
    %v465 = vld [vmem:[#allocation8 + $0x24] sm:$0xf]
    %v466 = vld [vmem:[#allocation8 + $0x28] sm:$0xf]
    %v467 = vld [vmem:[#allocation8 + $0x2c] sm:$0xf]
    %v468 = vld [vmem:[#allocation8 + $0x30] sm:$0xf]
    %v469 = vld [vmem:[#allocation8 + $0x34] sm:$0xf]
    %v470 = vld [vmem:[#allocation8 + $0x38] sm:$0xf]
    %v471 = vld [vmem:[#allocation8 + $0x3c] sm:$0xf]
    %v472 = vld [vmem:[%s10] sm:$0x1]
    %v474 = vlaneseq
    %v475 = vshrl.u32 %v474, 7
    %v476 = vsub.s32 0, %v475
    %v477 = vrot.slane %v472, %v476
    %v495 = vunpack.c.l.b16 %v456
    %v496 = vunpack.c.l.b16 %v457
    %v497 = vunpack.c.l.b16 %v458
    %v498 = vunpack.c.l.b16 %v459
    %v499 = vunpack.c.l.b16 %v460
    %v500 = vunpack.c.l.b16 %v461
    %v501 = vunpack.c.l.b16 %v462
    %v502 = vunpack.c.l.b16 %v463
    %v503 = vunpack.c.l.b16 %v464
    %v504 = vunpack.c.l.b16 %v465
    %v505 = vunpack.c.l.b16 %v466
    %v506 = vunpack.c.l.b16 %v467
    %v507 = vunpack.c.l.b16 %v468
    %v508 = vunpack.c.l.b16 %v469
    %v509 = vunpack.c.l.b16 %v470
    %v510 = vunpack.c.l.b16 %v471
    %v511 = vpack.c.b16 %v496, %v495
    %v512 = vpack.c.b16 %v498, %v497
    %v513 = vpack.c.b16 %v500, %v499
    %v514 = vpack.c.b16 %v502, %v501
    %v515 = vpack.c.b16 %v504, %v503
    %v516 = vpack.c.b16 %v506, %v505
    %v517 = vpack.c.b16 %v508, %v507
    %v518 = vpack.c.b16 %v510, %v509
    %527 = vmatprep.subr.bf16.mxu0 0
    %528 = vmatpush1.bf16.msra.mxu0 %v511
    %529 = vmatprep.subr.bf16.mxu0 0
    %530 = vmatpush1.bf16.msra.mxu0 %v512
    %531 = vmatprep.subr.bf16.mxu0 0
    %532 = vmatpush1.bf16.msra.mxu0 %v513
    %533 = vmatprep.subr.bf16.mxu0 0
    %534 = vmatpush1.bf16.msra.mxu0 %v514
    %535 = vmatprep.subr.bf16.mxu0 0
    %536 = vmatpush1.bf16.msra.mxu0 %v515
    %537 = vmatprep.subr.bf16.mxu0 0
    %538 = vmatpush1.bf16.msra.mxu0 %v516
    %539 = vmatprep.subr.bf16.mxu0 0
    %540 = vmatpush1.bf16.msra.mxu0 %v517
    %541 = vmatprep.subr.bf16.mxu0 0
    %542 = vmatpush1.bf16.msra.mxu0 %v518
    %543 = vmatprep.subr.bf16.mxu0 0
    %544 = vmatpush1.bf16.msra.mxu0 0
    %545 = vmatprep.subr.bf16.mxu0 0
    %546 = vmatpush1.bf16.msra.mxu0 0
    %547 = vmatprep.subr.bf16.mxu0 0
    %548 = vmatpush1.bf16.msra.mxu0 0
    %549 = vmatprep.subr.bf16.mxu0 0
    %550 = vmatpush1.bf16.msra.mxu0 0
    %551 = vmatprep.subr.bf16.mxu0 0
    %552 = vmatpush1.bf16.msra.mxu0 0
    %553 = vmatprep.subr.bf16.mxu0 0
    %554 = vmatpush1.bf16.msra.mxu0 0
    %555 = vmatprep.subr.bf16.mxu0 0
    %556 = vmatpush1.bf16.msra.mxu0 0
    %557 = vmatprep.subr.bf16.mxu0 0
    %558 = vmatpush1.bf16.msra.mxu0 0
    %559 = vmatprep.mubr.bf16.mxu0 0
    %560 = vmatmul.mubr.bf16.gmra.mrb[0].mxu0 %v455
    %v561 = vpop.f32.mrb[0].mxu0
    %v562 = vadd.f32 %v477, %v561
    %v563 = vpop.f32.mrb[0].mxu0
    %v564 = vpop.f32.mrb[0].mxu0
    %v565 = vadd.f32 %v477, %v564
    %v566 = vpop.f32.mrb[0].mxu0
    %567 = vdwg.mxu0
    %v568 = vpack.c.bf16 %v565, %v562
    %v569 = vld [vmem:[#allocation10] sm:$0xf]
    %v570 = vld [vmem:[#allocation10 + $0x4] sm:$0xf]
    %v571 = vld [vmem:[#allocation10 + $0x8] sm:$0xf]
    %v572 = vld [vmem:[#allocation10 + $0xc] sm:$0xf]
    %v573 = vld [vmem:[#allocation10 + $0x10] sm:$0xf]
    %v574 = vld [vmem:[#allocation10 + $0x14] sm:$0xf]
    %v575 = vld [vmem:[#allocation10 + $0x18] sm:$0xf]
    %v576 = vld [vmem:[#allocation10 + $0x1c] sm:$0xf]
    %v577 = vld [vmem:[#allocation10 + $0x20] sm:$0xf]
    %v578 = vld [vmem:[#allocation10 + $0x24] sm:$0xf]
    %v579 = vld [vmem:[#allocation10 + $0x28] sm:$0xf]
    %v580 = vld [vmem:[#allocation10 + $0x2c] sm:$0xf]
    %v581 = vld [vmem:[#allocation10 + $0x30] sm:$0xf]
    %v582 = vld [vmem:[#allocation10 + $0x34] sm:$0xf]
    %v583 = vld [vmem:[#allocation10 + $0x38] sm:$0xf]
    %v584 = vld [vmem:[#allocation10 + $0x3c] sm:$0xf]
    %v585 = vld [vmem:[%s12] sm:$0x1]
    %v587 = vlaneseq
    %v588 = vshrl.u32 %v587, 7
    %v589 = vsub.s32 0, %v588
    %v590 = vrot.slane %v585, %v589
    %v608 = vunpack.c.l.b16 %v569
    %v609 = vunpack.c.l.b16 %v570
    %v610 = vunpack.c.l.b16 %v571
    %v611 = vunpack.c.l.b16 %v572
    %v612 = vunpack.c.l.b16 %v573
    %v613 = vunpack.c.l.b16 %v574
    %v614 = vunpack.c.l.b16 %v575
    %v615 = vunpack.c.l.b16 %v576
    %v616 = vunpack.c.l.b16 %v577
    %v617 = vunpack.c.l.b16 %v578
    %v618 = vunpack.c.l.b16 %v579
    %v619 = vunpack.c.l.b16 %v580
    %v620 = vunpack.c.l.b16 %v581
    %v621 = vunpack.c.l.b16 %v582
    %v622 = vunpack.c.l.b16 %v583
    %v623 = vunpack.c.l.b16 %v584
    %v624 = vpack.c.b16 %v609, %v608
    %v625 = vpack.c.b16 %v611, %v610
    %v626 = vpack.c.b16 %v613, %v612
    %v627 = vpack.c.b16 %v615, %v614
    %v628 = vpack.c.b16 %v617, %v616
    %v629 = vpack.c.b16 %v619, %v618
    %v630 = vpack.c.b16 %v621, %v620
    %v631 = vpack.c.b16 %v623, %v622
    %640 = vmatprep.subr.bf16.mxu0 0
    %641 = vmatpush1.bf16.msra.mxu0 %v624
    %642 = vmatprep.subr.bf16.mxu0 0
    %643 = vmatpush1.bf16.msra.mxu0 %v625
    %644 = vmatprep.subr.bf16.mxu0 0
    %645 = vmatpush1.bf16.msra.mxu0 %v626
    %646 = vmatprep.subr.bf16.mxu0 0
    %647 = vmatpush1.bf16.msra.mxu0 %v627
    %648 = vmatprep.subr.bf16.mxu0 0
    %649 = vmatpush1.bf16.msra.mxu0 %v628
    %650 = vmatprep.subr.bf16.mxu0 0
    %651 = vmatpush1.bf16.msra.mxu0 %v629
    %652 = vmatprep.subr.bf16.mxu0 0
    %653 = vmatpush1.bf16.msra.mxu0 %v630
    %654 = vmatprep.subr.bf16.mxu0 0
    %655 = vmatpush1.bf16.msra.mxu0 %v631
    %656 = vmatprep.subr.bf16.mxu0 0
    %657 = vmatpush1.bf16.msra.mxu0 0
    %658 = vmatprep.subr.bf16.mxu0 0
    %659 = vmatpush1.bf16.msra.mxu0 0
    %660 = vmatprep.subr.bf16.mxu0 0
    %661 = vmatpush1.bf16.msra.mxu0 0
    %662 = vmatprep.subr.bf16.mxu0 0
    %663 = vmatpush1.bf16.msra.mxu0 0
    %664 = vmatprep.subr.bf16.mxu0 0
    %665 = vmatpush1.bf16.msra.mxu0 0
    %666 = vmatprep.subr.bf16.mxu0 0
    %667 = vmatpush1.bf16.msra.mxu0 0
    %668 = vmatprep.subr.bf16.mxu0 0
    %669 = vmatpush1.bf16.msra.mxu0 0
    %670 = vmatprep.subr.bf16.mxu0 0
    %671 = vmatpush1.bf16.msra.mxu0 0
    %672 = vmatprep.mubr.bf16.mxu0 0
    %673 = vmatmul.mubr.bf16.gmra.mrb[0].mxu0 %v568
    %v674 = vpop.f32.mrb[0].mxu0
    %v675 = vadd.f32 %v590, %v674
    %v676 = vpop.f32.mrb[0].mxu0
    %v677 = vpop.f32.mrb[0].mxu0
    %v678 = vadd.f32 %v590, %v677
    %v679 = vpop.f32.mrb[0].mxu0
    %680 = vdwg.mxu0
    %681 = vst [vmem:[#allocation11] sm:$0xff] %v675
    %682 = vst [vmem:[#allocation11 + $0x8] sm:$0xff] %v678
    // Predicated region
    $region74: #{tpu_custom_call.1} parent=1 // pred_check
      _
    $region75: #{tpu_custom_call.1} parent=1 // pred_check_branch
      %684 = sbr.rel (0) target = $region77
    $region76: #{tpu_custom_call.1} parent=1 // pred_region
      %s686 = ssub.s32 256, 256
      %687 = vsyncadd [#allocation4], %s686
      %s688 = sshll.u32 [#allocation11], 4
      %s689 = int_to_ptr.vmem [resolvable:$true] %s688
      %694 = dma.vmem_to_hbm [thread:$0]  %s689, 256, %s13, [#allocation4], 128, 128, 8
    $region77: #{tpu_custom_call.1} parent=1 // pred_fallthru
      _
    // Predicated region
    $region78: #{tpu_custom_call.1} parent=1 // pred_check
      _
    $region79: #{tpu_custom_call.1} parent=1 // pred_check_branch
      %696 = sbr.rel (0) target = $region81
    $region80: #{tpu_custom_call.1} parent=1 // pred_region
      %697 = dma.done [#allocation4], 256
    $region81: #{tpu_custom_call.1} parent=1 // pred_fallthru
      _
    %698 = vsyncpa [#allocation3], 1
    %699 = vsyncpa [#allocation6], 1
    %700 = vsyncpa [#allocation9], 1
    %701 = vsyncpa [#allocation4], 1

</llo_original>
